<compile_context>
chip_gen: v7x
topology: tpu7x:2x2x1
jax: 0.10.0
libtpu: 0.0.40
codegen_flags: <defaults>
</compile_context>

<pallas_src>
import jax
import jax.numpy as jnp
from jax import lax
from jax.experimental import pallas as pl
from jax.experimental.pallas import tpu as pltpu

C_IN = 4   # 3 masked-image channels + 1 mask channel
C_OUT = 3  # RGB output
K = 3      # 3x3 conv


def _lama_band_kernel(img_ref, mask_ref, halo_ref, w_ref, b_ref, out_ref):
    """One (batch, row-band) tile per grid step.

    img_ref : (1, 3, TH, Wp)       image band                        (VMEM)
    mask_ref: (1, 1, TH, Wp)       mask band                         (VMEM)
    halo_ref: (1, 1, 8, Wp)        [img_above(3), mask_above(1),
                                    img_below(3), mask_below(1)]     (VMEM)
    w_ref   : (C_OUT*C_IN*K*K,)    flattened conv weights            (SMEM)
    b_ref   : (C_OUT,)             conv bias                         (SMEM)
    out_ref : (1, 3, TH, Wp)       inpainted band                    (VMEM)
    """
    TH = out_ref.shape[2]
    Wp = out_ref.shape[3]

    m = mask_ref[0, 0]                       # (TH, Wp)
    inv_m = 1.0 - m
    halo = halo_ref[0, 0]                    # (8, Wp)
    top_m = halo[3:4, :]                     # (1, Wp) mask row above band
    bot_m = halo[7:8, :]                     # (1, Wp) mask row below band

    row = lax.broadcasted_iota(jnp.int32, (TH, Wp), 0)
    col = lax.broadcasted_iota(jnp.int32, (TH, Wp), 1)
    is_first_row = row == 0
    is_last_row = row == TH - 1
    is_first_col = col == 0
    is_last_col = col == Wp - 1

    # Accumulators initialized directly from the bias (no zeros+add pass).
    accs = [jnp.full((TH, Wp), b_ref[co], dtype=jnp.float32)
            for co in range(C_OUT)]

    for ci in range(C_IN):
        # Build conv-input channel ci of x = [image*(1-mask), mask] in-kernel.
        if ci < C_OUT:
            xc = img_ref[0, ci] * inv_m                        # (TH, Wp)
            top = halo[ci:ci + 1, :] * (1.0 - top_m)           # (1, Wp)
            bot = halo[4 + ci:5 + ci, :] * (1.0 - bot_m)       # (1, Wp)
        else:
            xc = m
            top = top_m
            bot = bot_m

        # Row-shifted bases: roll within the band, patch the wrapped edge row
        # with the halo row (zero halo at the global image border).
        x_up = jnp.where(is_first_row,
                         jnp.broadcast_to(top, (TH, Wp)),
                         pltpu.roll(xc, shift=1, axis=0))       # x(r-1, w)
        x_dn = jnp.where(is_last_row,
                         jnp.broadcast_to(bot, (TH, Wp)),
                         pltpu.roll(xc, shift=TH - 1, axis=0))  # x(r+1, w)

        for kh, base in ((0, x_up), (1, xc), (2, x_dn)):
            # Column-shifted planes via lane roll + edge-column zeroing
            # (SAME zero padding).  Each plane is reused by all 3 outputs.
            left = jnp.where(is_first_col, 0.0,
                             pltpu.roll(base, shift=1, axis=1))       # (.., w-1)
            right = jnp.where(is_last_col, 0.0,
                              pltpu.roll(base, shift=Wp - 1, axis=1))  # (.., w+1)
            for kw, plane in ((0, left), (1, base), (2, right)):
                for co in range(C_OUT):
                    flat = ((co * C_IN + ci) * K + kh) * K + kw
                    accs[co] = accs[co] + w_ref[flat] * plane

    for co in range(C_OUT):
        pred = jax.nn.sigmoid(accs[co])
        out_ref[0, co] = m * pred + inv_m * img_ref[0, co]


def _generator_pallas(image, mask, w_flat, bias):
    """image: (N, 3, H8, W8), mask: (N, 1, H8, W8); H8, W8 multiples of 8.

    Returns the inpainted result at the padded resolution (N, 3, Hp, Wp);
    the caller crops back to the original size.
    """
    N, _, H8, W8 = image.shape

    # Lane-dense width (multiple of 128); band height sized so one band plane
    # stays around <=512 KiB f32 (keeps per-step VMEM well under scoped limits
    # on v5e/v6e/v7x while giving the pipeline enough steps).
    Wp = ((W8 + 127) // 128) * 128
    TH = max(8, min(128, (128 * 1024 // Wp) // 8 * 8))
    TH = min(TH, H8)
    NB = -(-H8 // TH)           # number of row bands (ceil)
    Hp = NB * TH

    # Zero-extend to (Hp, Wp).  The zero extension reproduces the SAME zero
    # padding of the conv at the (H8, W8) boundary, and the composite in the
    # extension is just the (zero) image since mask == 0 there; it is cropped.
    pad_h, pad_w = Hp - H8, Wp - W8
    if pad_h or pad_w:
        image = jnp.pad(image, ((0, 0), (0, 0), (0, pad_h), (0, pad_w)))
        mask = jnp.pad(mask, ((0, 0), (0, 0), (0, pad_h), (0, pad_w)))

    # Per-band halo rows (row just above / just below each band): a tiny
    # (N, NB, 8, Wp) side input instead of overlapping band DMAs.
    zi = jnp.zeros((N, C_OUT, 1, Wp), image.dtype)
    zm = jnp.zeros((N, 1, 1, Wp), mask.dtype)
    top_i = jnp.concatenate([zi, image[:, :, TH - 1:Hp - 1:TH, :]], axis=2)
    top_m = jnp.concatenate([zm, mask[:, :, TH - 1:Hp - 1:TH, :]], axis=2)
    bot_i = jnp.concatenate([image[:, :, TH:Hp:TH, :], zi], axis=2)
    bot_m = jnp.concatenate([mask[:, :, TH:Hp:TH, :], zm], axis=2)
    halo = jnp.concatenate([top_i, top_m, bot_i, bot_m], axis=1)  # (N,8,NB,Wp)
    halo = jnp.transpose(halo, (0, 2, 1, 3))                      # (N,NB,8,Wp)

    return pl.pallas_call(
        _lama_band_kernel,
        out_shape=jax.ShapeDtypeStruct((N, C_OUT, Hp, Wp), jnp.float32),
        grid=(N, NB),
        in_specs=[
            pl.BlockSpec((1, C_OUT, TH, Wp), lambda n, h: (n, 0, h, 0)),
            pl.BlockSpec((1, 1, TH, Wp), lambda n, h: (n, 0, h, 0)),
            pl.BlockSpec((1, 1, 2 * C_IN, Wp), lambda n, h: (n, h, 0, 0)),
            pl.BlockSpec(memory_space=pltpu.MemorySpace.SMEM),
            pl.BlockSpec(memory_space=pltpu.MemorySpace.SMEM),
        ],
        out_specs=pl.BlockSpec((1, C_OUT, TH, Wp), lambda n, h: (n, 0, h, 0)),
        compiler_params=pltpu.CompilerParams(
            dimension_semantics=("parallel", "parallel")),
    )(image, mask, halo, w_flat, bias)


def lama_inpainting_forward(params, image, mask):
    """Mirrors LAMAInpaintingModule.forward semantics."""
    w_flat, bias = params

    # --- dim promotion (as in the PyTorch wrapper) ---
    if image.ndim == 3:
        image = image[None]
    if mask.ndim == 2:
        mask = mask[None, None]
    elif mask.ndim == 3:
        mask = mask[None]
    image = image.astype(jnp.float32)
    mask = mask.astype(jnp.float32)

    orig_h, orig_w = image.shape[2], image.shape[3]

    # --- pad to modulo 8 (reflect), as in pad_img_to_modulo ---
    ph = (-orig_h) % 8
    pw = (-orig_w) % 8
    if ph or pw:
        image_p = jnp.pad(image, ((0, 0), (0, 0), (0, ph), (0, pw)), mode="reflect")
        mask_p = jnp.pad(mask, ((0, 0), (0, 0), (0, ph), (0, pw)), mode="reflect")
    else:
        image_p, mask_p = image, mask

    inpainted = _generator_pallas(image_p, mask_p, w_flat, bias)

    # --- crop back + squeeze batch ---
    cur_res = inpainted[:, :, :orig_h, :orig_w]
    return cur_res[0]


def _reference(params, image, mask):
    """Pure-JAX reference of the synthetic generator forward (for checking)."""
    w_flat, bias = params
    w = w_flat.reshape(C_OUT, C_IN, K, K)
    if image.ndim == 3:
        image = image[None]
    if mask.ndim == 2:
        mask = mask[None, None]
    elif mask.ndim == 3:
        mask = mask[None]
    image = image.astype(jnp.float32)
    mask = mask.astype(jnp.float32)
    orig_h, orig_w = image.shape[2], image.shape[3]
    ph = (-orig_h) % 8
    pw = (-orig_w) % 8
    if ph or pw:
        image = jnp.pad(image, ((0, 0), (0, 0), (0, ph), (0, pw)), mode="reflect")
        mask = jnp.pad(mask, ((0, 0), (0, 0), (0, ph), (0, pw)), mode="reflect")
    masked = image * (1.0 - mask)
    x = jnp.concatenate([masked, mask], axis=1)
    y = lax.conv_general_dilated(
        x, w, window_strides=(1, 1), padding="SAME",
        dimension_numbers=("NCHW", "OIHW", "NCHW"))
    pred = jax.nn.sigmoid(y + bias[None, :, None, None])
    out = mask * pred + (1.0 - mask) * image
    return out[0, :, :orig_h, :orig_w]


if __name__ == "__main__":
    # Deterministic synthetic "checkpoint" parameters + example inputs.
    wkey, bkey, ikey, mkey = jax.random.split(jax.random.PRNGKey(0), 4)
    w_flat = (jax.random.normal(wkey, (C_OUT * C_IN * K * K,), jnp.float32)
              * (1.0 / (C_IN * K * K) ** 0.5))
    bias = jax.random.normal(bkey, (C_OUT,), jnp.float32) * 0.1
    params = (w_flat, bias)

    # image (3, 16, 16), mask (16, 16) — same promotion path as the module.
    image = jax.random.uniform(ikey, (3, 16, 16), jnp.float32)
    mask = (jax.random.uniform(mkey, (16, 16), jnp.float32) > 0.5).astype(jnp.float32)

    out = lama_inpainting_forward(params, image, mask)
    out = jax.block_until_ready(out)
    assert out.shape == (3, 16, 16), out.shape

    ref = jax.block_until_ready(_reference(params, image, mask))
    assert jnp.allclose(out, ref, atol=2e-5), float(jnp.max(jnp.abs(out - ref)))

    print("KERNEL_OK")
</pallas_src>

<mosaic_0001>
module attributes {stable_mosaic.version = 11 : i64} {
  func.func @_lama_band_kernel(%arg0: i32, %arg1: i32, %arg2: memref<1x3x16x128xf32, #tpu.memory_space<vmem>>, %arg3: memref<1x1x16x128xf32, #tpu.memory_space<vmem>>, %arg4: memref<1x1x8x128xf32, #tpu.memory_space<vmem>>, %arg5: memref<108xf32, #tpu.memory_space<smem>>, %arg6: memref<3xf32, #tpu.memory_space<smem>>, %arg7: memref<1x3x16x128xf32, #tpu.memory_space<vmem>>) attributes {dimension_semantics = [#tpu.dimension_semantics<parallel>, #tpu.dimension_semantics<parallel>], iteration_bounds = array<i64: 1, 1>, scalar_prefetch = 0 : i64, scratch_operands = 0 : i64, tpu.core_type = #tpu.core_type<tc>, window_params = [{transform_indices = @transform_0, window_bounds = array<i64: 1, 3, 16, 128>}, {transform_indices = @transform_1, window_bounds = array<i64: 1, 1, 16, 128>}, {transform_indices = @transform_2, window_bounds = array<i64: 1, 1, 8, 128>}, {transform_indices = @transform_3, window_bounds = array<i64: 108>}, {transform_indices = @transform_4, window_bounds = array<i64: 3>}, {transform_indices = @transform_5, window_bounds = array<i64: 1, 3, 16, 128>}]} {
    %c0 = arith.constant 0 : index
    %c0_0 = arith.constant 0 : index
    %c0_1 = arith.constant 0 : index
    %c0_2 = arith.constant 0 : index
    %0 = vector.load %arg3[%c0, %c0_0, %c0_1, %c0_2] : memref<1x1x16x128xf32, #tpu.memory_space<vmem>>, vector<1x1x16x128xf32>
    %1 = vector.shape_cast %0 : vector<1x1x16x128xf32> to vector<16x128xf32>
    %cst = arith.constant 1.000000e+00 : f32
    %2 = vector.broadcast %cst : f32 to vector<16x128xf32>
    %3 = arith.subf %2, %1 : vector<16x128xf32>
    %c0_3 = arith.constant 0 : index
    %c0_4 = arith.constant 0 : index
    %c0_5 = arith.constant 0 : index
    %c0_6 = arith.constant 0 : index
    %4 = vector.load %arg4[%c0_3, %c0_4, %c0_5, %c0_6] : memref<1x1x8x128xf32, #tpu.memory_space<vmem>>, vector<1x1x8x128xf32>
    %5 = vector.shape_cast %4 : vector<1x1x8x128xf32> to vector<8x128xf32>
    %6 = vector.extract_strided_slice %5 {offsets = [3, 0], sizes = [1, 128], strides = [1, 1]} : vector<8x128xf32> to vector<1x128xf32>
    %7 = vector.extract_strided_slice %5 {offsets = [7, 0], sizes = [1, 128], strides = [1, 1]} : vector<8x128xf32> to vector<1x128xf32>
    %8 = tpu.iota {dimensions = array<i32: 0>} : vector<16x128xi32>
    %9 = tpu.iota {dimensions = array<i32: 1>} : vector<16x128xi32>
    %c0_i32 = arith.constant 0 : i32
    %10 = vector.broadcast %c0_i32 : i32 to vector<16x128xi32>
    %11 = arith.cmpi eq, %8, %10 : vector<16x128xi32>
    %c15_i32 = arith.constant 15 : i32
    %12 = vector.broadcast %c15_i32 : i32 to vector<16x128xi32>
    %13 = arith.cmpi eq, %8, %12 : vector<16x128xi32>
    %c0_i32_7 = arith.constant 0 : i32
    %14 = vector.broadcast %c0_i32_7 : i32 to vector<16x128xi32>
    %15 = arith.cmpi eq, %9, %14 : vector<16x128xi32>
    %c127_i32 = arith.constant 127 : i32
    %16 = vector.broadcast %c127_i32 : i32 to vector<16x128xi32>
    %17 = arith.cmpi eq, %9, %16 : vector<16x128xi32>
    %c0_8 = arith.constant 0 : index
    %18 = memref.load %arg6[%c0_8] : memref<3xf32, #tpu.memory_space<smem>>
    %19 = vector.broadcast %18 : f32 to vector<16x128xf32>
    %c1 = arith.constant 1 : index
    %20 = memref.load %arg6[%c1] : memref<3xf32, #tpu.memory_space<smem>>
    %21 = vector.broadcast %20 : f32 to vector<16x128xf32>
    %c2 = arith.constant 2 : index
    %22 = memref.load %arg6[%c2] : memref<3xf32, #tpu.memory_space<smem>>
    %23 = vector.broadcast %22 : f32 to vector<16x128xf32>
    %c0_9 = arith.constant 0 : index
    %c0_10 = arith.constant 0 : index
    %c0_11 = arith.constant 0 : index
    %c0_12 = arith.constant 0 : index
    %24 = vector.load %arg2[%c0_9, %c0_10, %c0_11, %c0_12] : memref<1x3x16x128xf32, #tpu.memory_space<vmem>>, vector<1x1x16x128xf32>
    %25 = vector.shape_cast %24 : vector<1x1x16x128xf32> to vector<16x128xf32>
    %26 = arith.mulf %25, %3 : vector<16x128xf32>
    %27 = vector.extract_strided_slice %5 {offsets = [0, 0], sizes = [1, 128], strides = [1, 1]} : vector<8x128xf32> to vector<1x128xf32>
    %cst_13 = arith.constant 1.000000e+00 : f32
    %28 = vector.broadcast %cst_13 : f32 to vector<1x128xf32>
    %29 = arith.subf %28, %6 : vector<1x128xf32>
    %30 = arith.mulf %27, %29 : vector<1x128xf32>
    %31 = vector.extract_strided_slice %5 {offsets = [4, 0], sizes = [1, 128], strides = [1, 1]} : vector<8x128xf32> to vector<1x128xf32>
    %cst_14 = arith.constant 1.000000e+00 : f32
    %32 = vector.broadcast %cst_14 : f32 to vector<1x128xf32>
    %33 = arith.subf %32, %7 : vector<1x128xf32>
    %34 = arith.mulf %31, %33 : vector<1x128xf32>
    %35 = vector.shape_cast %30 : vector<1x128xf32> to vector<1x128xf32>
    %36 = vector.broadcast %35 : vector<1x128xf32> to vector<16x128xf32>
    %c1_i32 = arith.constant 1 : i32
    %37 = tpu.dynamic_rotate %26 by %c1_i32 dim 0 : vector<16x128xf32>, i32 -> vector<16x128xf32>
    %38 = arith.select %11, %36, %37 : vector<16x128xi1>, vector<16x128xf32>
    %39 = vector.shape_cast %34 : vector<1x128xf32> to vector<1x128xf32>
    %40 = vector.broadcast %39 : vector<1x128xf32> to vector<16x128xf32>
    %c15_i32_15 = arith.constant 15 : i32
    %41 = tpu.dynamic_rotate %26 by %c15_i32_15 dim 0 : vector<16x128xf32>, i32 -> vector<16x128xf32>
    %42 = arith.select %13, %40, %41 : vector<16x128xi1>, vector<16x128xf32>
    %c1_i32_16 = arith.constant 1 : i32
    %43 = tpu.dynamic_rotate %38 by %c1_i32_16 dim 1 : vector<16x128xf32>, i32 -> vector<16x128xf32>
    %cst_17 = arith.constant 0.000000e+00 : f32
    %44 = vector.broadcast %cst_17 : f32 to vector<16x128xf32>
    %45 = arith.select %15, %44, %43 : vector<16x128xi1>, vector<16x128xf32>
    %c127_i32_18 = arith.constant 127 : i32
    %46 = tpu.dynamic_rotate %38 by %c127_i32_18 dim 1 : vector<16x128xf32>, i32 -> vector<16x128xf32>
    %cst_19 = arith.constant 0.000000e+00 : f32
    %47 = vector.broadcast %cst_19 : f32 to vector<16x128xf32>
    %48 = arith.select %17, %47, %46 : vector<16x128xi1>, vector<16x128xf32>
    %c0_20 = arith.constant 0 : index
    %49 = memref.load %arg5[%c0_20] : memref<108xf32, #tpu.memory_space<smem>>
    %50 = vector.broadcast %49 : f32 to vector<16x128xf32>
    %51 = arith.mulf %50, %45 : vector<16x128xf32>
    %52 = arith.addf %19, %51 : vector<16x128xf32>
    %c36 = arith.constant 36 : index
    %53 = memref.load %arg5[%c36] : memref<108xf32, #tpu.memory_space<smem>>
    %54 = vector.broadcast %53 : f32 to vector<16x128xf32>
    %55 = arith.mulf %54, %45 : vector<16x128xf32>
    %56 = arith.addf %21, %55 : vector<16x128xf32>
    %c72 = arith.constant 72 : index
    %57 = memref.load %arg5[%c72] : memref<108xf32, #tpu.memory_space<smem>>
    %58 = vector.broadcast %57 : f32 to vector<16x128xf32>
    %59 = arith.mulf %58, %45 : vector<16x128xf32>
    %60 = arith.addf %23, %59 : vector<16x128xf32>
    %c1_21 = arith.constant 1 : index
    %61 = memref.load %arg5[%c1_21] : memref<108xf32, #tpu.memory_space<smem>>
    %62 = vector.broadcast %61 : f32 to vector<16x128xf32>
    %63 = arith.mulf %62, %38 : vector<16x128xf32>
    %64 = arith.addf %52, %63 : vector<16x128xf32>
    %c37 = arith.constant 37 : index
    %65 = memref.load %arg5[%c37] : memref<108xf32, #tpu.memory_space<smem>>
    %66 = vector.broadcast %65 : f32 to vector<16x128xf32>
    %67 = arith.mulf %66, %38 : vector<16x128xf32>
    %68 = arith.addf %56, %67 : vector<16x128xf32>
    %c73 = arith.constant 73 : index
    %69 = memref.load %arg5[%c73] : memref<108xf32, #tpu.memory_space<smem>>
    %70 = vector.broadcast %69 : f32 to vector<16x128xf32>
    %71 = arith.mulf %70, %38 : vector<16x128xf32>
    %72 = arith.addf %60, %71 : vector<16x128xf32>
    %c2_22 = arith.constant 2 : index
    %73 = memref.load %arg5[%c2_22] : memref<108xf32, #tpu.memory_space<smem>>
    %74 = vector.broadcast %73 : f32 to vector<16x128xf32>
    %75 = arith.mulf %74, %48 : vector<16x128xf32>
    %76 = arith.addf %64, %75 : vector<16x128xf32>
    %c38 = arith.constant 38 : index
    %77 = memref.load %arg5[%c38] : memref<108xf32, #tpu.memory_space<smem>>
    %78 = vector.broadcast %77 : f32 to vector<16x128xf32>
    %79 = arith.mulf %78, %48 : vector<16x128xf32>
    %80 = arith.addf %68, %79 : vector<16x128xf32>
    %c74 = arith.constant 74 : index
    %81 = memref.load %arg5[%c74] : memref<108xf32, #tpu.memory_space<smem>>
    %82 = vector.broadcast %81 : f32 to vector<16x128xf32>
    %83 = arith.mulf %82, %48 : vector<16x128xf32>
    %84 = arith.addf %72, %83 : vector<16x128xf32>
    %c1_i32_23 = arith.constant 1 : i32
    %85 = tpu.dynamic_rotate %26 by %c1_i32_23 dim 1 : vector<16x128xf32>, i32 -> vector<16x128xf32>
    %cst_24 = arith.constant 0.000000e+00 : f32
    %86 = vector.broadcast %cst_24 : f32 to vector<16x128xf32>
    %87 = arith.select %15, %86, %85 : vector<16x128xi1>, vector<16x128xf32>
    %c127_i32_25 = arith.constant 127 : i32
    %88 = tpu.dynamic_rotate %26 by %c127_i32_25 dim 1 : vector<16x128xf32>, i32 -> vector<16x128xf32>
    %cst_26 = arith.constant 0.000000e+00 : f32
    %89 = vector.broadcast %cst_26 : f32 to vector<16x128xf32>
    %90 = arith.select %17, %89, %88 : vector<16x128xi1>, vector<16x128xf32>
    %c3 = arith.constant 3 : index
    %91 = memref.load %arg5[%c3] : memref<108xf32, #tpu.memory_space<smem>>
    %92 = vector.broadcast %91 : f32 to vector<16x128xf32>
    %93 = arith.mulf %92, %87 : vector<16x128xf32>
    %94 = arith.addf %76, %93 : vector<16x128xf32>
    %c39 = arith.constant 39 : index
    %95 = memref.load %arg5[%c39] : memref<108xf32, #tpu.memory_space<smem>>
    %96 = vector.broadcast %95 : f32 to vector<16x128xf32>
    %97 = arith.mulf %96, %87 : vector<16x128xf32>
    %98 = arith.addf %80, %97 : vector<16x128xf32>
    %c75 = arith.constant 75 : index
    %99 = memref.load %arg5[%c75] : memref<108xf32, #tpu.memory_space<smem>>
    %100 = vector.broadcast %99 : f32 to vector<16x128xf32>
    %101 = arith.mulf %100, %87 : vector<16x128xf32>
    %102 = arith.addf %84, %101 : vector<16x128xf32>
    %c4 = arith.constant 4 : index
    %103 = memref.load %arg5[%c4] : memref<108xf32, #tpu.memory_space<smem>>
    %104 = vector.broadcast %103 : f32 to vector<16x128xf32>
    %105 = arith.mulf %104, %26 : vector<16x128xf32>
    %106 = arith.addf %94, %105 : vector<16x128xf32>
    %c40 = arith.constant 40 : index
    %107 = memref.load %arg5[%c40] : memref<108xf32, #tpu.memory_space<smem>>
    %108 = vector.broadcast %107 : f32 to vector<16x128xf32>
    %109 = arith.mulf %108, %26 : vector<16x128xf32>
    %110 = arith.addf %98, %109 : vector<16x128xf32>
    %c76 = arith.constant 76 : index
    %111 = memref.load %arg5[%c76] : memref<108xf32, #tpu.memory_space<smem>>
    %112 = vector.broadcast %111 : f32 to vector<16x128xf32>
    %113 = arith.mulf %112, %26 : vector<16x128xf32>
    %114 = arith.addf %102, %113 : vector<16x128xf32>
    %c5 = arith.constant 5 : index
    %115 = memref.load %arg5[%c5] : memref<108xf32, #tpu.memory_space<smem>>
    %116 = vector.broadcast %115 : f32 to vector<16x128xf32>
    %117 = arith.mulf %116, %90 : vector<16x128xf32>
    %118 = arith.addf %106, %117 : vector<16x128xf32>
    %c41 = arith.constant 41 : index
    %119 = memref.load %arg5[%c41] : memref<108xf32, #tpu.memory_space<smem>>
    %120 = vector.broadcast %119 : f32 to vector<16x128xf32>
    %121 = arith.mulf %120, %90 : vector<16x128xf32>
    %122 = arith.addf %110, %121 : vector<16x128xf32>
    %c77 = arith.constant 77 : index
    %123 = memref.load %arg5[%c77] : memref<108xf32, #tpu.memory_space<smem>>
    %124 = vector.broadcast %123 : f32 to vector<16x128xf32>
    %125 = arith.mulf %124, %90 : vector<16x128xf32>
    %126 = arith.addf %114, %125 : vector<16x128xf32>
    %c1_i32_27 = arith.constant 1 : i32
    %127 = tpu.dynamic_rotate %42 by %c1_i32_27 dim 1 : vector<16x128xf32>, i32 -> vector<16x128xf32>
    %cst_28 = arith.constant 0.000000e+00 : f32
    %128 = vector.broadcast %cst_28 : f32 to vector<16x128xf32>
    %129 = arith.select %15, %128, %127 : vector<16x128xi1>, vector<16x128xf32>
    %c127_i32_29 = arith.constant 127 : i32
    %130 = tpu.dynamic_rotate %42 by %c127_i32_29 dim 1 : vector<16x128xf32>, i32 -> vector<16x128xf32>
    %cst_30 = arith.constant 0.000000e+00 : f32
    %131 = vector.broadcast %cst_30 : f32 to vector<16x128xf32>
    %132 = arith.select %17, %131, %130 : vector<16x128xi1>, vector<16x128xf32>
    %c6 = arith.constant 6 : index
    %133 = memref.load %arg5[%c6] : memref<108xf32, #tpu.memory_space<smem>>
    %134 = vector.broadcast %133 : f32 to vector<16x128xf32>
    %135 = arith.mulf %134, %129 : vector<16x128xf32>
    %136 = arith.addf %118, %135 : vector<16x128xf32>
    %c42 = arith.constant 42 : index
    %137 = memref.load %arg5[%c42] : memref<108xf32, #tpu.memory_space<smem>>
    %138 = vector.broadcast %137 : f32 to vector<16x128xf32>
    %139 = arith.mulf %138, %129 : vector<16x128xf32>
    %140 = arith.addf %122, %139 : vector<16x128xf32>
    %c78 = arith.constant 78 : index
    %141 = memref.load %arg5[%c78] : memref<108xf32, #tpu.memory_space<smem>>
    %142 = vector.broadcast %141 : f32 to vector<16x128xf32>
    %143 = arith.mulf %142, %129 : vector<16x128xf32>
    %144 = arith.addf %126, %143 : vector<16x128xf32>
    %c7 = arith.constant 7 : index
    %145 = memref.load %arg5[%c7] : memref<108xf32, #tpu.memory_space<smem>>
    %146 = vector.broadcast %145 : f32 to vector<16x128xf32>
    %147 = arith.mulf %146, %42 : vector<16x128xf32>
    %148 = arith.addf %136, %147 : vector<16x128xf32>
    %c43 = arith.constant 43 : index
    %149 = memref.load %arg5[%c43] : memref<108xf32, #tpu.memory_space<smem>>
    %150 = vector.broadcast %149 : f32 to vector<16x128xf32>
    %151 = arith.mulf %150, %42 : vector<16x128xf32>
    %152 = arith.addf %140, %151 : vector<16x128xf32>
    %c79 = arith.constant 79 : index
    %153 = memref.load %arg5[%c79] : memref<108xf32, #tpu.memory_space<smem>>
    %154 = vector.broadcast %153 : f32 to vector<16x128xf32>
    %155 = arith.mulf %154, %42 : vector<16x128xf32>
    %156 = arith.addf %144, %155 : vector<16x128xf32>
    %c8 = arith.constant 8 : index
    %157 = memref.load %arg5[%c8] : memref<108xf32, #tpu.memory_space<smem>>
    %158 = vector.broadcast %157 : f32 to vector<16x128xf32>
    %159 = arith.mulf %158, %132 : vector<16x128xf32>
    %160 = arith.addf %148, %159 : vector<16x128xf32>
    %c44 = arith.constant 44 : index
    %161 = memref.load %arg5[%c44] : memref<108xf32, #tpu.memory_space<smem>>
    %162 = vector.broadcast %161 : f32 to vector<16x128xf32>
    %163 = arith.mulf %162, %132 : vector<16x128xf32>
    %164 = arith.addf %152, %163 : vector<16x128xf32>
    %c80 = arith.constant 80 : index
    %165 = memref.load %arg5[%c80] : memref<108xf32, #tpu.memory_space<smem>>
    %166 = vector.broadcast %165 : f32 to vector<16x128xf32>
    %167 = arith.mulf %166, %132 : vector<16x128xf32>
    %168 = arith.addf %156, %167 : vector<16x128xf32>
    %c0_31 = arith.constant 0 : index
    %c1_32 = arith.constant 1 : index
    %c0_33 = arith.constant 0 : index
    %c0_34 = arith.constant 0 : index
    %169 = vector.load %arg2[%c0_31, %c1_32, %c0_33, %c0_34] : memref<1x3x16x128xf32, #tpu.memory_space<vmem>>, vector<1x1x16x128xf32>
    %170 = vector.shape_cast %169 : vector<1x1x16x128xf32> to vector<16x128xf32>
    %171 = arith.mulf %170, %3 : vector<16x128xf32>
    %172 = vector.extract_strided_slice %5 {offsets = [1, 0], sizes = [1, 128], strides = [1, 1]} : vector<8x128xf32> to vector<1x128xf32>
    %cst_35 = arith.constant 1.000000e+00 : f32
    %173 = vector.broadcast %cst_35 : f32 to vector<1x128xf32>
    %174 = arith.subf %173, %6 : vector<1x128xf32>
    %175 = arith.mulf %172, %174 : vector<1x128xf32>
    %176 = vector.extract_strided_slice %5 {offsets = [5, 0], sizes = [1, 128], strides = [1, 1]} : vector<8x128xf32> to vector<1x128xf32>
    %cst_36 = arith.constant 1.000000e+00 : f32
    %177 = vector.broadcast %cst_36 : f32 to vector<1x128xf32>
    %178 = arith.subf %177, %7 : vector<1x128xf32>
    %179 = arith.mulf %176, %178 : vector<1x128xf32>
    %180 = vector.shape_cast %175 : vector<1x128xf32> to vector<1x128xf32>
    %181 = vector.broadcast %180 : vector<1x128xf32> to vector<16x128xf32>
    %c1_i32_37 = arith.constant 1 : i32
    %182 = tpu.dynamic_rotate %171 by %c1_i32_37 dim 0 : vector<16x128xf32>, i32 -> vector<16x128xf32>
    %183 = arith.select %11, %181, %182 : vector<16x128xi1>, vector<16x128xf32>
    %184 = vector.shape_cast %179 : vector<1x128xf32> to vector<1x128xf32>
    %185 = vector.broadcast %184 : vector<1x128xf32> to vector<16x128xf32>
    %c15_i32_38 = arith.constant 15 : i32
    %186 = tpu.dynamic_rotate %171 by %c15_i32_38 dim 0 : vector<16x128xf32>, i32 -> vector<16x128xf32>
    %187 = arith.select %13, %185, %186 : vector<16x128xi1>, vector<16x128xf32>
    %c1_i32_39 = arith.constant 1 : i32
    %188 = tpu.dynamic_rotate %183 by %c1_i32_39 dim 1 : vector<16x128xf32>, i32 -> vector<16x128xf32>
    %cst_40 = arith.constant 0.000000e+00 : f32
    %189 = vector.broadcast %cst_40 : f32 to vector<16x128xf32>
    %190 = arith.select %15, %189, %188 : vector<16x128xi1>, vector<16x128xf32>
    %c127_i32_41 = arith.constant 127 : i32
    %191 = tpu.dynamic_rotate %183 by %c127_i32_41 dim 1 : vector<16x128xf32>, i32 -> vector<16x128xf32>
    %cst_42 = arith.constant 0.000000e+00 : f32
    %192 = vector.broadcast %cst_42 : f32 to vector<16x128xf32>
    %193 = arith.select %17, %192, %191 : vector<16x128xi1>, vector<16x128xf32>
    %c9 = arith.constant 9 : index
    %194 = memref.load %arg5[%c9] : memref<108xf32, #tpu.memory_space<smem>>
    %195 = vector.broadcast %194 : f32 to vector<16x128xf32>
    %196 = arith.mulf %195, %190 : vector<16x128xf32>
    %197 = arith.addf %160, %196 : vector<16x128xf32>
    %c45 = arith.constant 45 : index
    %198 = memref.load %arg5[%c45] : memref<108xf32, #tpu.memory_space<smem>>
    %199 = vector.broadcast %198 : f32 to vector<16x128xf32>
    %200 = arith.mulf %199, %190 : vector<16x128xf32>
    %201 = arith.addf %164, %200 : vector<16x128xf32>
    %c81 = arith.constant 81 : index
    %202 = memref.load %arg5[%c81] : memref<108xf32, #tpu.memory_space<smem>>
    %203 = vector.broadcast %202 : f32 to vector<16x128xf32>
    %204 = arith.mulf %203, %190 : vector<16x128xf32>
    %205 = arith.addf %168, %204 : vector<16x128xf32>
    %c10 = arith.constant 10 : index
    %206 = memref.load %arg5[%c10] : memref<108xf32, #tpu.memory_space<smem>>
    %207 = vector.broadcast %206 : f32 to vector<16x128xf32>
    %208 = arith.mulf %207, %183 : vector<16x128xf32>
    %209 = arith.addf %197, %208 : vector<16x128xf32>
    %c46 = arith.constant 46 : index
    %210 = memref.load %arg5[%c46] : memref<108xf32, #tpu.memory_space<smem>>
    %211 = vector.broadcast %210 : f32 to vector<16x128xf32>
    %212 = arith.mulf %211, %183 : vector<16x128xf32>
    %213 = arith.addf %201, %212 : vector<16x128xf32>
    %c82 = arith.constant 82 : index
    %214 = memref.load %arg5[%c82] : memref<108xf32, #tpu.memory_space<smem>>
    %215 = vector.broadcast %214 : f32 to vector<16x128xf32>
    %216 = arith.mulf %215, %183 : vector<16x128xf32>
    %217 = arith.addf %205, %216 : vector<16x128xf32>
    %c11 = arith.constant 11 : index
    %218 = memref.load %arg5[%c11] : memref<108xf32, #tpu.memory_space<smem>>
    %219 = vector.broadcast %218 : f32 to vector<16x128xf32>
    %220 = arith.mulf %219, %193 : vector<16x128xf32>
    %221 = arith.addf %209, %220 : vector<16x128xf32>
    %c47 = arith.constant 47 : index
    %222 = memref.load %arg5[%c47] : memref<108xf32, #tpu.memory_space<smem>>
    %223 = vector.broadcast %222 : f32 to vector<16x128xf32>
    %224 = arith.mulf %223, %193 : vector<16x128xf32>
    %225 = arith.addf %213, %224 : vector<16x128xf32>
    %c83 = arith.constant 83 : index
    %226 = memref.load %arg5[%c83] : memref<108xf32, #tpu.memory_space<smem>>
    %227 = vector.broadcast %226 : f32 to vector<16x128xf32>
    %228 = arith.mulf %227, %193 : vector<16x128xf32>
    %229 = arith.addf %217, %228 : vector<16x128xf32>
    %c1_i32_43 = arith.constant 1 : i32
    %230 = tpu.dynamic_rotate %171 by %c1_i32_43 dim 1 : vector<16x128xf32>, i32 -> vector<16x128xf32>
    %cst_44 = arith.constant 0.000000e+00 : f32
    %231 = vector.broadcast %cst_44 : f32 to vector<16x128xf32>
    %232 = arith.select %15, %231, %230 : vector<16x128xi1>, vector<16x128xf32>
    %c127_i32_45 = arith.constant 127 : i32
    %233 = tpu.dynamic_rotate %171 by %c127_i32_45 dim 1 : vector<16x128xf32>, i32 -> vector<16x128xf32>
    %cst_46 = arith.constant 0.000000e+00 : f32
    %234 = vector.broadcast %cst_46 : f32 to vector<16x128xf32>
    %235 = arith.select %17, %234, %233 : vector<16x128xi1>, vector<16x128xf32>
    %c12 = arith.constant 12 : index
    %236 = memref.load %arg5[%c12] : memref<108xf32, #tpu.memory_space<smem>>
    %237 = vector.broadcast %236 : f32 to vector<16x128xf32>
    %238 = arith.mulf %237, %232 : vector<16x128xf32>
    %239 = arith.addf %221, %238 : vector<16x128xf32>
    %c48 = arith.constant 48 : index
    %240 = memref.load %arg5[%c48] : memref<108xf32, #tpu.memory_space<smem>>
    %241 = vector.broadcast %240 : f32 to vector<16x128xf32>
    %242 = arith.mulf %241, %232 : vector<16x128xf32>
    %243 = arith.addf %225, %242 : vector<16x128xf32>
    %c84 = arith.constant 84 : index
    %244 = memref.load %arg5[%c84] : memref<108xf32, #tpu.memory_space<smem>>
    %245 = vector.broadcast %244 : f32 to vector<16x128xf32>
    %246 = arith.mulf %245, %232 : vector<16x128xf32>
    %247 = arith.addf %229, %246 : vector<16x128xf32>
    %c13 = arith.constant 13 : index
    %248 = memref.load %arg5[%c13] : memref<108xf32, #tpu.memory_space<smem>>
    %249 = vector.broadcast %248 : f32 to vector<16x128xf32>
    %250 = arith.mulf %249, %171 : vector<16x128xf32>
    %251 = arith.addf %239, %250 : vector<16x128xf32>
    %c49 = arith.constant 49 : index
    %252 = memref.load %arg5[%c49] : memref<108xf32, #tpu.memory_space<smem>>
    %253 = vector.broadcast %252 : f32 to vector<16x128xf32>
    %254 = arith.mulf %253, %171 : vector<16x128xf32>
    %255 = arith.addf %243, %254 : vector<16x128xf32>
    %c85 = arith.constant 85 : index
    %256 = memref.load %arg5[%c85] : memref<108xf32, #tpu.memory_space<smem>>
    %257 = vector.broadcast %256 : f32 to vector<16x128xf32>
    %258 = arith.mulf %257, %171 : vector<16x128xf32>
    %259 = arith.addf %247, %258 : vector<16x128xf32>
    %c14 = arith.constant 14 : index
    %260 = memref.load %arg5[%c14] : memref<108xf32, #tpu.memory_space<smem>>
    %261 = vector.broadcast %260 : f32 to vector<16x128xf32>
    %262 = arith.mulf %261, %235 : vector<16x128xf32>
    %263 = arith.addf %251, %262 : vector<16x128xf32>
    %c50 = arith.constant 50 : index
    %264 = memref.load %arg5[%c50] : memref<108xf32, #tpu.memory_space<smem>>
    %265 = vector.broadcast %264 : f32 to vector<16x128xf32>
    %266 = arith.mulf %265, %235 : vector<16x128xf32>
    %267 = arith.addf %255, %266 : vector<16x128xf32>
    %c86 = arith.constant 86 : index
    %268 = memref.load %arg5[%c86] : memref<108xf32, #tpu.memory_space<smem>>
    %269 = vector.broadcast %268 : f32 to vector<16x128xf32>
    %270 = arith.mulf %269, %235 : vector<16x128xf32>
    %271 = arith.addf %259, %270 : vector<16x128xf32>
    %c1_i32_47 = arith.constant 1 : i32
    %272 = tpu.dynamic_rotate %187 by %c1_i32_47 dim 1 : vector<16x128xf32>, i32 -> vector<16x128xf32>
    %cst_48 = arith.constant 0.000000e+00 : f32
    %273 = vector.broadcast %cst_48 : f32 to vector<16x128xf32>
    %274 = arith.select %15, %273, %272 : vector<16x128xi1>, vector<16x128xf32>
    %c127_i32_49 = arith.constant 127 : i32
    %275 = tpu.dynamic_rotate %187 by %c127_i32_49 dim 1 : vector<16x128xf32>, i32 -> vector<16x128xf32>
    %cst_50 = arith.constant 0.000000e+00 : f32
    %276 = vector.broadcast %cst_50 : f32 to vector<16x128xf32>
    %277 = arith.select %17, %276, %275 : vector<16x128xi1>, vector<16x128xf32>
    %c15 = arith.constant 15 : index
    %278 = memref.load %arg5[%c15] : memref<108xf32, #tpu.memory_space<smem>>
    %279 = vector.broadcast %278 : f32 to vector<16x128xf32>
    %280 = arith.mulf %279, %274 : vector<16x128xf32>
    %281 = arith.addf %263, %280 : vector<16x128xf32>
    %c51 = arith.constant 51 : index
    %282 = memref.load %arg5[%c51] : memref<108xf32, #tpu.memory_space<smem>>
    %283 = vector.broadcast %282 : f32 to vector<16x128xf32>
    %284 = arith.mulf %283, %274 : vector<16x128xf32>
    %285 = arith.addf %267, %284 : vector<16x128xf32>
    %c87 = arith.constant 87 : index
    %286 = memref.load %arg5[%c87] : memref<108xf32, #tpu.memory_space<smem>>
    %287 = vector.broadcast %286 : f32 to vector<16x128xf32>
    %288 = arith.mulf %287, %274 : vector<16x128xf32>
    %289 = arith.addf %271, %288 : vector<16x128xf32>
    %c16 = arith.constant 16 : index
    %290 = memref.load %arg5[%c16] : memref<108xf32, #tpu.memory_space<smem>>
    %291 = vector.broadcast %290 : f32 to vector<16x128xf32>
    %292 = arith.mulf %291, %187 : vector<16x128xf32>
    %293 = arith.addf %281, %292 : vector<16x128xf32>
    %c52 = arith.constant 52 : index
    %294 = memref.load %arg5[%c52] : memref<108xf32, #tpu.memory_space<smem>>
    %295 = vector.broadcast %294 : f32 to vector<16x128xf32>
    %296 = arith.mulf %295, %187 : vector<16x128xf32>
    %297 = arith.addf %285, %296 : vector<16x128xf32>
    %c88 = arith.constant 88 : index
    %298 = memref.load %arg5[%c88] : memref<108xf32, #tpu.memory_space<smem>>
    %299 = vector.broadcast %298 : f32 to vector<16x128xf32>
    %300 = arith.mulf %299, %187 : vector<16x128xf32>
    %301 = arith.addf %289, %300 : vector<16x128xf32>
    %c17 = arith.constant 17 : index
    %302 = memref.load %arg5[%c17] : memref<108xf32, #tpu.memory_space<smem>>
    %303 = vector.broadcast %302 : f32 to vector<16x128xf32>
    %304 = arith.mulf %303, %277 : vector<16x128xf32>
    %305 = arith.addf %293, %304 : vector<16x128xf32>
    %c53 = arith.constant 53 : index
    %306 = memref.load %arg5[%c53] : memref<108xf32, #tpu.memory_space<smem>>
    %307 = vector.broadcast %306 : f32 to vector<16x128xf32>
    %308 = arith.mulf %307, %277 : vector<16x128xf32>
    %309 = arith.addf %297, %308 : vector<16x128xf32>
    %c89 = arith.constant 89 : index
    %310 = memref.load %arg5[%c89] : memref<108xf32, #tpu.memory_space<smem>>
    %311 = vector.broadcast %310 : f32 to vector<16x128xf32>
    %312 = arith.mulf %311, %277 : vector<16x128xf32>
    %313 = arith.addf %301, %312 : vector<16x128xf32>
    %c0_51 = arith.constant 0 : index
    %c2_52 = arith.constant 2 : index
    %c0_53 = arith.constant 0 : index
    %c0_54 = arith.constant 0 : index
    %314 = vector.load %arg2[%c0_51, %c2_52, %c0_53, %c0_54] : memref<1x3x16x128xf32, #tpu.memory_space<vmem>>, vector<1x1x16x128xf32>
    %315 = vector.shape_cast %314 : vector<1x1x16x128xf32> to vector<16x128xf32>
    %316 = arith.mulf %315, %3 : vector<16x128xf32>
    %317 = vector.extract_strided_slice %5 {offsets = [2, 0], sizes = [1, 128], strides = [1, 1]} : vector<8x128xf32> to vector<1x128xf32>
    %cst_55 = arith.constant 1.000000e+00 : f32
    %318 = vector.broadcast %cst_55 : f32 to vector<1x128xf32>
    %319 = arith.subf %318, %6 : vector<1x128xf32>
    %320 = arith.mulf %317, %319 : vector<1x128xf32>
    %321 = vector.extract_strided_slice %5 {offsets = [6, 0], sizes = [1, 128], strides = [1, 1]} : vector<8x128xf32> to vector<1x128xf32>
    %cst_56 = arith.constant 1.000000e+00 : f32
    %322 = vector.broadcast %cst_56 : f32 to vector<1x128xf32>
    %323 = arith.subf %322, %7 : vector<1x128xf32>
    %324 = arith.mulf %321, %323 : vector<1x128xf32>
    %325 = vector.shape_cast %320 : vector<1x128xf32> to vector<1x128xf32>
    %326 = vector.broadcast %325 : vector<1x128xf32> to vector<16x128xf32>
    %c1_i32_57 = arith.constant 1 : i32
    %327 = tpu.dynamic_rotate %316 by %c1_i32_57 dim 0 : vector<16x128xf32>, i32 -> vector<16x128xf32>
    %328 = arith.select %11, %326, %327 : vector<16x128xi1>, vector<16x128xf32>
    %329 = vector.shape_cast %324 : vector<1x128xf32> to vector<1x128xf32>
    %330 = vector.broadcast %329 : vector<1x128xf32> to vector<16x128xf32>
    %c15_i32_58 = arith.constant 15 : i32
    %331 = tpu.dynamic_rotate %316 by %c15_i32_58 dim 0 : vector<16x128xf32>, i32 -> vector<16x128xf32>
    %332 = arith.select %13, %330, %331 : vector<16x128xi1>, vector<16x128xf32>
    %c1_i32_59 = arith.constant 1 : i32
    %333 = tpu.dynamic_rotate %328 by %c1_i32_59 dim 1 : vector<16x128xf32>, i32 -> vector<16x128xf32>
    %cst_60 = arith.constant 0.000000e+00 : f32
    %334 = vector.broadcast %cst_60 : f32 to vector<16x128xf32>
    %335 = arith.select %15, %334, %333 : vector<16x128xi1>, vector<16x128xf32>
    %c127_i32_61 = arith.constant 127 : i32
    %336 = tpu.dynamic_rotate %328 by %c127_i32_61 dim 1 : vector<16x128xf32>, i32 -> vector<16x128xf32>
    %cst_62 = arith.constant 0.000000e+00 : f32
    %337 = vector.broadcast %cst_62 : f32 to vector<16x128xf32>
    %338 = arith.select %17, %337, %336 : vector<16x128xi1>, vector<16x128xf32>
    %c18 = arith.constant 18 : index
    %339 = memref.load %arg5[%c18] : memref<108xf32, #tpu.memory_space<smem>>
    %340 = vector.broadcast %339 : f32 to vector<16x128xf32>
    %341 = arith.mulf %340, %335 : vector<16x128xf32>
    %342 = arith.addf %305, %341 : vector<16x128xf32>
    %c54 = arith.constant 54 : index
    %343 = memref.load %arg5[%c54] : memref<108xf32, #tpu.memory_space<smem>>
    %344 = vector.broadcast %343 : f32 to vector<16x128xf32>
    %345 = arith.mulf %344, %335 : vector<16x128xf32>
    %346 = arith.addf %309, %345 : vector<16x128xf32>
    %c90 = arith.constant 90 : index
    %347 = memref.load %arg5[%c90] : memref<108xf32, #tpu.memory_space<smem>>
    %348 = vector.broadcast %347 : f32 to vector<16x128xf32>
    %349 = arith.mulf %348, %335 : vector<16x128xf32>
    %350 = arith.addf %313, %349 : vector<16x128xf32>
    %c19 = arith.constant 19 : index
    %351 = memref.load %arg5[%c19] : memref<108xf32, #tpu.memory_space<smem>>
    %352 = vector.broadcast %351 : f32 to vector<16x128xf32>
    %353 = arith.mulf %352, %328 : vector<16x128xf32>
    %354 = arith.addf %342, %353 : vector<16x128xf32>
    %c55 = arith.constant 55 : index
    %355 = memref.load %arg5[%c55] : memref<108xf32, #tpu.memory_space<smem>>
    %356 = vector.broadcast %355 : f32 to vector<16x128xf32>
    %357 = arith.mulf %356, %328 : vector<16x128xf32>
    %358 = arith.addf %346, %357 : vector<16x128xf32>
    %c91 = arith.constant 91 : index
    %359 = memref.load %arg5[%c91] : memref<108xf32, #tpu.memory_space<smem>>
    %360 = vector.broadcast %359 : f32 to vector<16x128xf32>
    %361 = arith.mulf %360, %328 : vector<16x128xf32>
    %362 = arith.addf %350, %361 : vector<16x128xf32>
    %c20 = arith.constant 20 : index
    %363 = memref.load %arg5[%c20] : memref<108xf32, #tpu.memory_space<smem>>
    %364 = vector.broadcast %363 : f32 to vector<16x128xf32>
    %365 = arith.mulf %364, %338 : vector<16x128xf32>
    %366 = arith.addf %354, %365 : vector<16x128xf32>
    %c56 = arith.constant 56 : index
    %367 = memref.load %arg5[%c56] : memref<108xf32, #tpu.memory_space<smem>>
    %368 = vector.broadcast %367 : f32 to vector<16x128xf32>
    %369 = arith.mulf %368, %338 : vector<16x128xf32>
    %370 = arith.addf %358, %369 : vector<16x128xf32>
    %c92 = arith.constant 92 : index
    %371 = memref.load %arg5[%c92] : memref<108xf32, #tpu.memory_space<smem>>
    %372 = vector.broadcast %371 : f32 to vector<16x128xf32>
    %373 = arith.mulf %372, %338 : vector<16x128xf32>
    %374 = arith.addf %362, %373 : vector<16x128xf32>
    %c1_i32_63 = arith.constant 1 : i32
    %375 = tpu.dynamic_rotate %316 by %c1_i32_63 dim 1 : vector<16x128xf32>, i32 -> vector<16x128xf32>
    %cst_64 = arith.constant 0.000000e+00 : f32
    %376 = vector.broadcast %cst_64 : f32 to vector<16x128xf32>
    %377 = arith.select %15, %376, %375 : vector<16x128xi1>, vector<16x128xf32>
    %c127_i32_65 = arith.constant 127 : i32
    %378 = tpu.dynamic_rotate %316 by %c127_i32_65 dim 1 : vector<16x128xf32>, i32 -> vector<16x128xf32>
    %cst_66 = arith.constant 0.000000e+00 : f32
    %379 = vector.broadcast %cst_66 : f32 to vector<16x128xf32>
    %380 = arith.select %17, %379, %378 : vector<16x128xi1>, vector<16x128xf32>
    %c21 = arith.constant 21 : index
    %381 = memref.load %arg5[%c21] : memref<108xf32, #tpu.memory_space<smem>>
    %382 = vector.broadcast %381 : f32 to vector<16x128xf32>
    %383 = arith.mulf %382, %377 : vector<16x128xf32>
    %384 = arith.addf %366, %383 : vector<16x128xf32>
    %c57 = arith.constant 57 : index
    %385 = memref.load %arg5[%c57] : memref<108xf32, #tpu.memory_space<smem>>
    %386 = vector.broadcast %385 : f32 to vector<16x128xf32>
    %387 = arith.mulf %386, %377 : vector<16x128xf32>
    %388 = arith.addf %370, %387 : vector<16x128xf32>
    %c93 = arith.constant 93 : index
    %389 = memref.load %arg5[%c93] : memref<108xf32, #tpu.memory_space<smem>>
    %390 = vector.broadcast %389 : f32 to vector<16x128xf32>
    %391 = arith.mulf %390, %377 : vector<16x128xf32>
    %392 = arith.addf %374, %391 : vector<16x128xf32>
    %c22 = arith.constant 22 : index
    %393 = memref.load %arg5[%c22] : memref<108xf32, #tpu.memory_space<smem>>
    %394 = vector.broadcast %393 : f32 to vector<16x128xf32>
    %395 = arith.mulf %394, %316 : vector<16x128xf32>
    %396 = arith.addf %384, %395 : vector<16x128xf32>
    %c58 = arith.constant 58 : index
    %397 = memref.load %arg5[%c58] : memref<108xf32, #tpu.memory_space<smem>>
    %398 = vector.broadcast %397 : f32 to vector<16x128xf32>
    %399 = arith.mulf %398, %316 : vector<16x128xf32>
    %400 = arith.addf %388, %399 : vector<16x128xf32>
    %c94 = arith.constant 94 : index
    %401 = memref.load %arg5[%c94] : memref<108xf32, #tpu.memory_space<smem>>
    %402 = vector.broadcast %401 : f32 to vector<16x128xf32>
    %403 = arith.mulf %402, %316 : vector<16x128xf32>
    %404 = arith.addf %392, %403 : vector<16x128xf32>
    %c23 = arith.constant 23 : index
    %405 = memref.load %arg5[%c23] : memref<108xf32, #tpu.memory_space<smem>>
    %406 = vector.broadcast %405 : f32 to vector<16x128xf32>
    %407 = arith.mulf %406, %380 : vector<16x128xf32>
    %408 = arith.addf %396, %407 : vector<16x128xf32>
    %c59 = arith.constant 59 : index
    %409 = memref.load %arg5[%c59] : memref<108xf32, #tpu.memory_space<smem>>
    %410 = vector.broadcast %409 : f32 to vector<16x128xf32>
    %411 = arith.mulf %410, %380 : vector<16x128xf32>
    %412 = arith.addf %400, %411 : vector<16x128xf32>
    %c95 = arith.constant 95 : index
    %413 = memref.load %arg5[%c95] : memref<108xf32, #tpu.memory_space<smem>>
    %414 = vector.broadcast %413 : f32 to vector<16x128xf32>
    %415 = arith.mulf %414, %380 : vector<16x128xf32>
    %416 = arith.addf %404, %415 : vector<16x128xf32>
    %c1_i32_67 = arith.constant 1 : i32
    %417 = tpu.dynamic_rotate %332 by %c1_i32_67 dim 1 : vector<16x128xf32>, i32 -> vector<16x128xf32>
    %cst_68 = arith.constant 0.000000e+00 : f32
    %418 = vector.broadcast %cst_68 : f32 to vector<16x128xf32>
    %419 = arith.select %15, %418, %417 : vector<16x128xi1>, vector<16x128xf32>
    %c127_i32_69 = arith.constant 127 : i32
    %420 = tpu.dynamic_rotate %332 by %c127_i32_69 dim 1 : vector<16x128xf32>, i32 -> vector<16x128xf32>
    %cst_70 = arith.constant 0.000000e+00 : f32
    %421 = vector.broadcast %cst_70 : f32 to vector<16x128xf32>
    %422 = arith.select %17, %421, %420 : vector<16x128xi1>, vector<16x128xf32>
    %c24 = arith.constant 24 : index
    %423 = memref.load %arg5[%c24] : memref<108xf32, #tpu.memory_space<smem>>
    %424 = vector.broadcast %423 : f32 to vector<16x128xf32>
    %425 = arith.mulf %424, %419 : vector<16x128xf32>
    %426 = arith.addf %408, %425 : vector<16x128xf32>
    %c60 = arith.constant 60 : index
    %427 = memref.load %arg5[%c60] : memref<108xf32, #tpu.memory_space<smem>>
    %428 = vector.broadcast %427 : f32 to vector<16x128xf32>
    %429 = arith.mulf %428, %419 : vector<16x128xf32>
    %430 = arith.addf %412, %429 : vector<16x128xf32>
    %c96 = arith.constant 96 : index
    %431 = memref.load %arg5[%c96] : memref<108xf32, #tpu.memory_space<smem>>
    %432 = vector.broadcast %431 : f32 to vector<16x128xf32>
    %433 = arith.mulf %432, %419 : vector<16x128xf32>
    %434 = arith.addf %416, %433 : vector<16x128xf32>
    %c25 = arith.constant 25 : index
    %435 = memref.load %arg5[%c25] : memref<108xf32, #tpu.memory_space<smem>>
    %436 = vector.broadcast %435 : f32 to vector<16x128xf32>
    %437 = arith.mulf %436, %332 : vector<16x128xf32>
    %438 = arith.addf %426, %437 : vector<16x128xf32>
    %c61 = arith.constant 61 : index
    %439 = memref.load %arg5[%c61] : memref<108xf32, #tpu.memory_space<smem>>
    %440 = vector.broadcast %439 : f32 to vector<16x128xf32>
    %441 = arith.mulf %440, %332 : vector<16x128xf32>
    %442 = arith.addf %430, %441 : vector<16x128xf32>
    %c97 = arith.constant 97 : index
    %443 = memref.load %arg5[%c97] : memref<108xf32, #tpu.memory_space<smem>>
    %444 = vector.broadcast %443 : f32 to vector<16x128xf32>
    %445 = arith.mulf %444, %332 : vector<16x128xf32>
    %446 = arith.addf %434, %445 : vector<16x128xf32>
    %c26 = arith.constant 26 : index
    %447 = memref.load %arg5[%c26] : memref<108xf32, #tpu.memory_space<smem>>
    %448 = vector.broadcast %447 : f32 to vector<16x128xf32>
    %449 = arith.mulf %448, %422 : vector<16x128xf32>
    %450 = arith.addf %438, %449 : vector<16x128xf32>
    %c62 = arith.constant 62 : index
    %451 = memref.load %arg5[%c62] : memref<108xf32, #tpu.memory_space<smem>>
    %452 = vector.broadcast %451 : f32 to vector<16x128xf32>
    %453 = arith.mulf %452, %422 : vector<16x128xf32>
    %454 = arith.addf %442, %453 : vector<16x128xf32>
    %c98 = arith.constant 98 : index
    %455 = memref.load %arg5[%c98] : memref<108xf32, #tpu.memory_space<smem>>
    %456 = vector.broadcast %455 : f32 to vector<16x128xf32>
    %457 = arith.mulf %456, %422 : vector<16x128xf32>
    %458 = arith.addf %446, %457 : vector<16x128xf32>
    %459 = vector.shape_cast %6 : vector<1x128xf32> to vector<1x128xf32>
    %460 = vector.broadcast %459 : vector<1x128xf32> to vector<16x128xf32>
    %c1_i32_71 = arith.constant 1 : i32
    %461 = tpu.dynamic_rotate %1 by %c1_i32_71 dim 0 : vector<16x128xf32>, i32 -> vector<16x128xf32>
    %462 = arith.select %11, %460, %461 : vector<16x128xi1>, vector<16x128xf32>
    %463 = vector.shape_cast %7 : vector<1x128xf32> to vector<1x128xf32>
    %464 = vector.broadcast %463 : vector<1x128xf32> to vector<16x128xf32>
    %c15_i32_72 = arith.constant 15 : i32
    %465 = tpu.dynamic_rotate %1 by %c15_i32_72 dim 0 : vector<16x128xf32>, i32 -> vector<16x128xf32>
    %466 = arith.select %13, %464, %465 : vector<16x128xi1>, vector<16x128xf32>
    %c1_i32_73 = arith.constant 1 : i32
    %467 = tpu.dynamic_rotate %462 by %c1_i32_73 dim 1 : vector<16x128xf32>, i32 -> vector<16x128xf32>
    %cst_74 = arith.constant 0.000000e+00 : f32
    %468 = vector.broadcast %cst_74 : f32 to vector<16x128xf32>
    %469 = arith.select %15, %468, %467 : vector<16x128xi1>, vector<16x128xf32>
    %c127_i32_75 = arith.constant 127 : i32
    %470 = tpu.dynamic_rotate %462 by %c127_i32_75 dim 1 : vector<16x128xf32>, i32 -> vector<16x128xf32>
    %cst_76 = arith.constant 0.000000e+00 : f32
    %471 = vector.broadcast %cst_76 : f32 to vector<16x128xf32>
    %472 = arith.select %17, %471, %470 : vector<16x128xi1>, vector<16x128xf32>
    %c27 = arith.constant 27 : index
    %473 = memref.load %arg5[%c27] : memref<108xf32, #tpu.memory_space<smem>>
    %474 = vector.broadcast %473 : f32 to vector<16x128xf32>
    %475 = arith.mulf %474, %469 : vector<16x128xf32>
    %476 = arith.addf %450, %475 : vector<16x128xf32>
    %c63 = arith.constant 63 : index
    %477 = memref.load %arg5[%c63] : memref<108xf32, #tpu.memory_space<smem>>
    %478 = vector.broadcast %477 : f32 to vector<16x128xf32>
    %479 = arith.mulf %478, %469 : vector<16x128xf32>
    %480 = arith.addf %454, %479 : vector<16x128xf32>
    %c99 = arith.constant 99 : index
    %481 = memref.load %arg5[%c99] : memref<108xf32, #tpu.memory_space<smem>>
    %482 = vector.broadcast %481 : f32 to vector<16x128xf32>
    %483 = arith.mulf %482, %469 : vector<16x128xf32>
    %484 = arith.addf %458, %483 : vector<16x128xf32>
    %c28 = arith.constant 28 : index
    %485 = memref.load %arg5[%c28] : memref<108xf32, #tpu.memory_space<smem>>
    %486 = vector.broadcast %485 : f32 to vector<16x128xf32>
    %487 = arith.mulf %486, %462 : vector<16x128xf32>
    %488 = arith.addf %476, %487 : vector<16x128xf32>
    %c64 = arith.constant 64 : index
    %489 = memref.load %arg5[%c64] : memref<108xf32, #tpu.memory_space<smem>>
    %490 = vector.broadcast %489 : f32 to vector<16x128xf32>
    %491 = arith.mulf %490, %462 : vector<16x128xf32>
    %492 = arith.addf %480, %491 : vector<16x128xf32>
    %c100 = arith.constant 100 : index
    %493 = memref.load %arg5[%c100] : memref<108xf32, #tpu.memory_space<smem>>
    %494 = vector.broadcast %493 : f32 to vector<16x128xf32>
    %495 = arith.mulf %494, %462 : vector<16x128xf32>
    %496 = arith.addf %484, %495 : vector<16x128xf32>
    %c29 = arith.constant 29 : index
    %497 = memref.load %arg5[%c29] : memref<108xf32, #tpu.memory_space<smem>>
    %498 = vector.broadcast %497 : f32 to vector<16x128xf32>
    %499 = arith.mulf %498, %472 : vector<16x128xf32>
    %500 = arith.addf %488, %499 : vector<16x128xf32>
    %c65 = arith.constant 65 : index
    %501 = memref.load %arg5[%c65] : memref<108xf32, #tpu.memory_space<smem>>
    %502 = vector.broadcast %501 : f32 to vector<16x128xf32>
    %503 = arith.mulf %502, %472 : vector<16x128xf32>
    %504 = arith.addf %492, %503 : vector<16x128xf32>
    %c101 = arith.constant 101 : index
    %505 = memref.load %arg5[%c101] : memref<108xf32, #tpu.memory_space<smem>>
    %506 = vector.broadcast %505 : f32 to vector<16x128xf32>
    %507 = arith.mulf %506, %472 : vector<16x128xf32>
    %508 = arith.addf %496, %507 : vector<16x128xf32>
    %c1_i32_77 = arith.constant 1 : i32
    %509 = tpu.dynamic_rotate %1 by %c1_i32_77 dim 1 : vector<16x128xf32>, i32 -> vector<16x128xf32>
    %cst_78 = arith.constant 0.000000e+00 : f32
    %510 = vector.broadcast %cst_78 : f32 to vector<16x128xf32>
    %511 = arith.select %15, %510, %509 : vector<16x128xi1>, vector<16x128xf32>
    %c127_i32_79 = arith.constant 127 : i32
    %512 = tpu.dynamic_rotate %1 by %c127_i32_79 dim 1 : vector<16x128xf32>, i32 -> vector<16x128xf32>
    %cst_80 = arith.constant 0.000000e+00 : f32
    %513 = vector.broadcast %cst_80 : f32 to vector<16x128xf32>
    %514 = arith.select %17, %513, %512 : vector<16x128xi1>, vector<16x128xf32>
    %c30 = arith.constant 30 : index
    %515 = memref.load %arg5[%c30] : memref<108xf32, #tpu.memory_space<smem>>
    %516 = vector.broadcast %515 : f32 to vector<16x128xf32>
    %517 = arith.mulf %516, %511 : vector<16x128xf32>
    %518 = arith.addf %500, %517 : vector<16x128xf32>
    %c66 = arith.constant 66 : index
    %519 = memref.load %arg5[%c66] : memref<108xf32, #tpu.memory_space<smem>>
    %520 = vector.broadcast %519 : f32 to vector<16x128xf32>
    %521 = arith.mulf %520, %511 : vector<16x128xf32>
    %522 = arith.addf %504, %521 : vector<16x128xf32>
    %c102 = arith.constant 102 : index
    %523 = memref.load %arg5[%c102] : memref<108xf32, #tpu.memory_space<smem>>
    %524 = vector.broadcast %523 : f32 to vector<16x128xf32>
    %525 = arith.mulf %524, %511 : vector<16x128xf32>
    %526 = arith.addf %508, %525 : vector<16x128xf32>
    %c31 = arith.constant 31 : index
    %527 = memref.load %arg5[%c31] : memref<108xf32, #tpu.memory_space<smem>>
    %528 = vector.broadcast %527 : f32 to vector<16x128xf32>
    %529 = arith.mulf %528, %1 : vector<16x128xf32>
    %530 = arith.addf %518, %529 : vector<16x128xf32>
    %c67 = arith.constant 67 : index
    %531 = memref.load %arg5[%c67] : memref<108xf32, #tpu.memory_space<smem>>
    %532 = vector.broadcast %531 : f32 to vector<16x128xf32>
    %533 = arith.mulf %532, %1 : vector<16x128xf32>
    %534 = arith.addf %522, %533 : vector<16x128xf32>
    %c103 = arith.constant 103 : index
    %535 = memref.load %arg5[%c103] : memref<108xf32, #tpu.memory_space<smem>>
    %536 = vector.broadcast %535 : f32 to vector<16x128xf32>
    %537 = arith.mulf %536, %1 : vector<16x128xf32>
    %538 = arith.addf %526, %537 : vector<16x128xf32>
    %c32 = arith.constant 32 : index
    %539 = memref.load %arg5[%c32] : memref<108xf32, #tpu.memory_space<smem>>
    %540 = vector.broadcast %539 : f32 to vector<16x128xf32>
    %541 = arith.mulf %540, %514 : vector<16x128xf32>
    %542 = arith.addf %530, %541 : vector<16x128xf32>
    %c68 = arith.constant 68 : index
    %543 = memref.load %arg5[%c68] : memref<108xf32, #tpu.memory_space<smem>>
    %544 = vector.broadcast %543 : f32 to vector<16x128xf32>
    %545 = arith.mulf %544, %514 : vector<16x128xf32>
    %546 = arith.addf %534, %545 : vector<16x128xf32>
    %c104 = arith.constant 104 : index
    %547 = memref.load %arg5[%c104] : memref<108xf32, #tpu.memory_space<smem>>
    %548 = vector.broadcast %547 : f32 to vector<16x128xf32>
    %549 = arith.mulf %548, %514 : vector<16x128xf32>
    %550 = arith.addf %538, %549 : vector<16x128xf32>
    %c1_i32_81 = arith.constant 1 : i32
    %551 = tpu.dynamic_rotate %466 by %c1_i32_81 dim 1 : vector<16x128xf32>, i32 -> vector<16x128xf32>
    %cst_82 = arith.constant 0.000000e+00 : f32
    %552 = vector.broadcast %cst_82 : f32 to vector<16x128xf32>
    %553 = arith.select %15, %552, %551 : vector<16x128xi1>, vector<16x128xf32>
    %c127_i32_83 = arith.constant 127 : i32
    %554 = tpu.dynamic_rotate %466 by %c127_i32_83 dim 1 : vector<16x128xf32>, i32 -> vector<16x128xf32>
    %cst_84 = arith.constant 0.000000e+00 : f32
    %555 = vector.broadcast %cst_84 : f32 to vector<16x128xf32>
    %556 = arith.select %17, %555, %554 : vector<16x128xi1>, vector<16x128xf32>
    %c33 = arith.constant 33 : index
    %557 = memref.load %arg5[%c33] : memref<108xf32, #tpu.memory_space<smem>>
    %558 = vector.broadcast %557 : f32 to vector<16x128xf32>
    %559 = arith.mulf %558, %553 : vector<16x128xf32>
    %560 = arith.addf %542, %559 : vector<16x128xf32>
    %c69 = arith.constant 69 : index
    %561 = memref.load %arg5[%c69] : memref<108xf32, #tpu.memory_space<smem>>
    %562 = vector.broadcast %561 : f32 to vector<16x128xf32>
    %563 = arith.mulf %562, %553 : vector<16x128xf32>
    %564 = arith.addf %546, %563 : vector<16x128xf32>
    %c105 = arith.constant 105 : index
    %565 = memref.load %arg5[%c105] : memref<108xf32, #tpu.memory_space<smem>>
    %566 = vector.broadcast %565 : f32 to vector<16x128xf32>
    %567 = arith.mulf %566, %553 : vector<16x128xf32>
    %568 = arith.addf %550, %567 : vector<16x128xf32>
    %c34 = arith.constant 34 : index
    %569 = memref.load %arg5[%c34] : memref<108xf32, #tpu.memory_space<smem>>
    %570 = vector.broadcast %569 : f32 to vector<16x128xf32>
    %571 = arith.mulf %570, %466 : vector<16x128xf32>
    %572 = arith.addf %560, %571 : vector<16x128xf32>
    %c70 = arith.constant 70 : index
    %573 = memref.load %arg5[%c70] : memref<108xf32, #tpu.memory_space<smem>>
    %574 = vector.broadcast %573 : f32 to vector<16x128xf32>
    %575 = arith.mulf %574, %466 : vector<16x128xf32>
    %576 = arith.addf %564, %575 : vector<16x128xf32>
    %c106 = arith.constant 106 : index
    %577 = memref.load %arg5[%c106] : memref<108xf32, #tpu.memory_space<smem>>
    %578 = vector.broadcast %577 : f32 to vector<16x128xf32>
    %579 = arith.mulf %578, %466 : vector<16x128xf32>
    %580 = arith.addf %568, %579 : vector<16x128xf32>
    %c35 = arith.constant 35 : index
    %581 = memref.load %arg5[%c35] : memref<108xf32, #tpu.memory_space<smem>>
    %582 = vector.broadcast %581 : f32 to vector<16x128xf32>
    %583 = arith.mulf %582, %556 : vector<16x128xf32>
    %584 = arith.addf %572, %583 : vector<16x128xf32>
    %c71 = arith.constant 71 : index
    %585 = memref.load %arg5[%c71] : memref<108xf32, #tpu.memory_space<smem>>
    %586 = vector.broadcast %585 : f32 to vector<16x128xf32>
    %587 = arith.mulf %586, %556 : vector<16x128xf32>
    %588 = arith.addf %576, %587 : vector<16x128xf32>
    %c107 = arith.constant 107 : index
    %589 = memref.load %arg5[%c107] : memref<108xf32, #tpu.memory_space<smem>>
    %590 = vector.broadcast %589 : f32 to vector<16x128xf32>
    %591 = arith.mulf %590, %556 : vector<16x128xf32>
    %592 = arith.addf %580, %591 : vector<16x128xf32>
    %593 = arith.negf %584 : vector<16x128xf32>
    %594 = math.exp %593 : vector<16x128xf32>
    %cst_85 = arith.constant 1.000000e+00 : f32
    %595 = vector.broadcast %cst_85 : f32 to vector<16x128xf32>
    %596 = arith.addf %595, %594 : vector<16x128xf32>
    %597 = arith.divf %595, %596 : vector<16x128xf32>
    %598 = arith.mulf %1, %597 : vector<16x128xf32>
    %c0_86 = arith.constant 0 : index
    %c0_87 = arith.constant 0 : index
    %c0_88 = arith.constant 0 : index
    %c0_89 = arith.constant 0 : index
    %599 = vector.load %arg2[%c0_86, %c0_87, %c0_88, %c0_89] : memref<1x3x16x128xf32, #tpu.memory_space<vmem>>, vector<1x1x16x128xf32>
    %600 = vector.shape_cast %599 : vector<1x1x16x128xf32> to vector<16x128xf32>
    %601 = arith.mulf %3, %600 : vector<16x128xf32>
    %602 = arith.addf %598, %601 : vector<16x128xf32>
    %c0_90 = arith.constant 0 : index
    %c0_91 = arith.constant 0 : index
    %c0_92 = arith.constant 0 : index
    %c0_93 = arith.constant 0 : index
    %603 = vector.load %arg7[%c0_90, %c0_91, %c0_92, %c0_93] : memref<1x3x16x128xf32, #tpu.memory_space<vmem>>, vector<1x1x16x128xf32>
    %604 = vector.shape_cast %603 : vector<1x1x16x128xf32> to vector<16x128xf32>
    %605 = vector.shape_cast %602 : vector<16x128xf32> to vector<1x1x16x128xf32>
    tpu.vector_store %arg7[%c0_90, %c0_91, %c0_92, %c0_93], %605 {strides = array<i32>} : memref<1x3x16x128xf32, #tpu.memory_space<vmem>>, vector<1x1x16x128xf32>,
    %606 = arith.negf %588 : vector<16x128xf32>
    %607 = math.exp %606 : vector<16x128xf32>
    %cst_94 = arith.constant 1.000000e+00 : f32
    %608 = vector.broadcast %cst_94 : f32 to vector<16x128xf32>
    %609 = arith.addf %608, %607 : vector<16x128xf32>
    %610 = arith.divf %608, %609 : vector<16x128xf32>
    %611 = arith.mulf %1, %610 : vector<16x128xf32>
    %c0_95 = arith.constant 0 : index
    %c1_96 = arith.constant 1 : index
    %c0_97 = arith.constant 0 : index
    %c0_98 = arith.constant 0 : index
    %612 = vector.load %arg2[%c0_95, %c1_96, %c0_97, %c0_98] : memref<1x3x16x128xf32, #tpu.memory_space<vmem>>, vector<1x1x16x128xf32>
    %613 = vector.shape_cast %612 : vector<1x1x16x128xf32> to vector<16x128xf32>
    %614 = arith.mulf %3, %613 : vector<16x128xf32>
    %615 = arith.addf %611, %614 : vector<16x128xf32>
    %c0_99 = arith.constant 0 : index
    %c1_100 = arith.constant 1 : index
    %c0_101 = arith.constant 0 : index
    %c0_102 = arith.constant 0 : index
    %616 = vector.load %arg7[%c0_99, %c1_100, %c0_101, %c0_102] : memref<1x3x16x128xf32, #tpu.memory_space<vmem>>, vector<1x1x16x128xf32>
    %617 = vector.shape_cast %616 : vector<1x1x16x128xf32> to vector<16x128xf32>
    %618 = vector.shape_cast %615 : vector<16x128xf32> to vector<1x1x16x128xf32>
    tpu.vector_store %arg7[%c0_99, %c1_100, %c0_101, %c0_102], %618 {strides = array<i32>} : memref<1x3x16x128xf32, #tpu.memory_space<vmem>>, vector<1x1x16x128xf32>,
    %619 = arith.negf %592 : vector<16x128xf32>
    %620 = math.exp %619 : vector<16x128xf32>
    %cst_103 = arith.constant 1.000000e+00 : f32
    %621 = vector.broadcast %cst_103 : f32 to vector<16x128xf32>
    %622 = arith.addf %621, %620 : vector<16x128xf32>
    %623 = arith.divf %621, %622 : vector<16x128xf32>
    %624 = arith.mulf %1, %623 : vector<16x128xf32>
    %c0_104 = arith.constant 0 : index
    %c2_105 = arith.constant 2 : index
    %c0_106 = arith.constant 0 : index
    %c0_107 = arith.constant 0 : index
    %625 = vector.load %arg2[%c0_104, %c2_105, %c0_106, %c0_107] : memref<1x3x16x128xf32, #tpu.memory_space<vmem>>, vector<1x1x16x128xf32>
    %626 = vector.shape_cast %625 : vector<1x1x16x128xf32> to vector<16x128xf32>
    %627 = arith.mulf %3, %626 : vector<16x128xf32>
    %628 = arith.addf %624, %627 : vector<16x128xf32>
    %c0_108 = arith.constant 0 : index
    %c2_109 = arith.constant 2 : index
    %c0_110 = arith.constant 0 : index
    %c0_111 = arith.constant 0 : index
    %629 = vector.load %arg7[%c0_108, %c2_109, %c0_110, %c0_111] : memref<1x3x16x128xf32, #tpu.memory_space<vmem>>, vector<1x1x16x128xf32>
    %630 = vector.shape_cast %629 : vector<1x1x16x128xf32> to vector<16x128xf32>
    %631 = vector.shape_cast %628 : vector<16x128xf32> to vector<1x1x16x128xf32>
    tpu.vector_store %arg7[%c0_108, %c2_109, %c0_110, %c0_111], %631 {strides = array<i32>} : memref<1x3x16x128xf32, #tpu.memory_space<vmem>>, vector<1x1x16x128xf32>,
    return
  }
  func.func @transform_0(%arg0: i32, %arg1: i32) -> (i32, i32, i32, i32) {
    %c0_i32 = arith.constant 0 : i32
    %c0_i32_0 = arith.constant 0 : i32
    %c0_i32_1 = arith.constant 0 : i32
    return %arg0, %c0_i32, %arg1, %c0_i32_0 : i32, i32, i32, i32
  }
  func.func @transform_1(%arg0: i32, %arg1: i32) -> (i32, i32, i32, i32) {
    %c0_i32 = arith.constant 0 : i32
    %c0_i32_0 = arith.constant 0 : i32
    %c0_i32_1 = arith.constant 0 : i32
    return %arg0, %c0_i32, %arg1, %c0_i32_0 : i32, i32, i32, i32
  }
  func.func @transform_2(%arg0: i32, %arg1: i32) -> (i32, i32, i32, i32) {
    %c0_i32 = arith.constant 0 : i32
    %c0_i32_0 = arith.constant 0 : i32
    %c0_i32_1 = arith.constant 0 : i32
    return %arg0, %arg1, %c0_i32, %c0_i32_0 : i32, i32, i32, i32
  }
  func.func @transform_3(%arg0: i32, %arg1: i32) -> i32 {
    %c0_i32 = arith.constant 0 : i32
    %c0_i32_0 = arith.constant 0 : i32
    return %c0_i32 : i32
  }
  func.func @transform_4(%arg0: i32, %arg1: i32) -> i32 {
    %c0_i32 = arith.constant 0 : i32
    %c0_i32_0 = arith.constant 0 : i32
    return %c0_i32 : i32
  }
  func.func @transform_5(%arg0: i32, %arg1: i32) -> (i32, i32, i32, i32) {
    %c0_i32 = arith.constant 0 : i32
    %c0_i32_0 = arith.constant 0 : i32
    %c0_i32_1 = arith.constant 0 : i32
    return %arg0, %c0_i32, %arg1, %c0_i32_0 : i32, i32, i32, i32
  }
}

</mosaic_0001>

<llo_original>
// kernel: tpu_custom_call.1
$region0: #{tpu_custom_call.1}
  #allocation0 [shape = 'u32[]', space=smem, size = 0x4, offset = 0x4, fixed_abs, tag = 'smem constant byte address 0x4 - core index']
  #allocation1 [shape = 'u32[144,128]{1,0:T(1,128)}', space=vmem, size = 0x12000, scoped, tag = 'internal scratch']
  %s0 = inlined_call_operand.hbm [shape: f32[1,3,16,128], index: 0, kind: input, shape index: {}]
  %s1 = inlined_call_operand.hbm [shape: f32[1,1,16,128], index: 1, kind: input, shape index: {}]
  %s2 = inlined_call_operand.hbm [shape: f32[1,1,8,128], index: 2, kind: input, shape index: {}]
  %s3 = inlined_call_operand.vmem [shape: f32[108], index: 3, kind: input, shape index: {}]
  %s4 = inlined_call_operand.vmem [shape: f32[3], index: 4, kind: input, shape index: {}]
  %s5 = inlined_call_operand.hbm [shape: f32[1,3,16,128], index: 5, kind: output, shape index: {}]
  %s6 = sld [smem:[#allocation0]]
  $region50: #{tpu_custom_call.1} parent=0
    _
  %s8 = ssub.s32 1, %s6
  %s9 = scalar_select 0, %s8, %s6
  $region1: #{tpu_custom_call.1} parent=0
    #allocation2 [shape = 'u8[24576]{0}', space=vmem, size = 0x6000, scoped, tag = 'input window, operand 0, single buffered']
    #allocation3 [shape = 's32[1]{0}', space=sflag, size = 0x4, scoped, tag = 'scoped memory for tpu_custom_call.1']
    #allocation4 [shape = 's32[1]{0}', space=sflag, size = 0x4, scoped, tag = 'scoped memory for tpu_custom_call.1']
    #allocation5 [shape = 's32[1]{0}', space=sflag, size = 0x4, scoped, tag = 'scoped memory for tpu_custom_call.1']
    #allocation6 [shape = 'u8[8192]{0}', space=vmem, size = 0x2000, scoped, tag = 'input window, operand 1, single buffered']
    #allocation7 [shape = 's32[1]{0}', space=sflag, size = 0x4, scoped, tag = 'scoped memory for tpu_custom_call.1']
    #allocation8 [shape = 'u8[4096]{0}', space=vmem, size = 0x1000, scoped, tag = 'input window, operand 2, single buffered']
    #allocation9 [shape = 'u8[512]{0}', space=smem, size = 0x200, scoped, tag = 'input window, operand 3, single buffered']
    #allocation10 [shape = 'u8[512]{0}', space=smem, size = 0x200, scoped, tag = 'input window, operand 4, single buffered']
    #allocation11 [shape = 's32[1]{0}', space=sflag, size = 0x4, scoped, tag = 'scoped memory for tpu_custom_call.1']
    #allocation12 [shape = 'u8[24576]{0}', space=vmem, size = 0x6000, scoped, tag = 'output window, operand 0, single buffered']
    %10 = vsyncpa [#allocation3], 0
    %11 = vsyncpa [#allocation7], 0
    %12 = vsyncpa [#allocation5], 0
    %13 = vsyncpa [#allocation11], 0
    %14 = vsyncpa [#allocation4], 0
    // Predicated region
    $region2: #{tpu_custom_call.1} parent=1 // pred_check
      _
    $region3: #{tpu_custom_call.1} parent=1 // pred_check_branch
      %16 = sbr.rel (0) target = $region5
    $region4: #{tpu_custom_call.1} parent=1 // pred_region
      %s18 = ssub.s32 768, 768
      %19 = vsyncadd [#allocation3], %s18
      %s20 = sshll.u32 [#allocation2], 4
      %s21 = int_to_ptr.vmem [resolvable:$true] %s20
      %26 = dma.hbm_to_vmem [thread:$0]  %s0, 768, %s21, [#allocation3], 128, 128, 8
    $region5: #{tpu_custom_call.1} parent=1 // pred_fallthru
      _
    // Predicated region
    $region6: #{tpu_custom_call.1} parent=1 // pred_check
      _
    $region7: #{tpu_custom_call.1} parent=1 // pred_check_branch
      %28 = sbr.rel (0) target = $region9
    $region8: #{tpu_custom_call.1} parent=1 // pred_region
      %s30 = ssub.s32 256, 256
      %31 = vsyncadd [#allocation7], %s30
      %s32 = sshll.u32 [#allocation6], 4
      %s33 = int_to_ptr.vmem [resolvable:$true] %s32
      %38 = dma.hbm_to_vmem [thread:$0]  %s1, 256, %s33, [#allocation7], 128, 128, 8
    $region9: #{tpu_custom_call.1} parent=1 // pred_fallthru
      _
    // Predicated region
    $region10: #{tpu_custom_call.1} parent=1 // pred_check
      _
    $region11: #{tpu_custom_call.1} parent=1 // pred_check_branch
      %40 = sbr.rel (0) target = $region13
    $region12: #{tpu_custom_call.1} parent=1 // pred_region
      %s42 = ssub.s32 128, 128
      %43 = vsyncadd [#allocation7], %s42
      %s45 = sshll.u32 [#allocation8], 4
      %s46 = int_to_ptr.vmem [resolvable:$true] %s45
      %48 = dma.hbm_to_vmem [thread:$0]  %s2, 128, %s46, [#allocation7]
    $region13: #{tpu_custom_call.1} parent=1 // pred_fallthru
      _
    // Predicated region
    $region14: #{tpu_custom_call.1} parent=1 // pred_check
      _
    $region15: #{tpu_custom_call.1} parent=1 // pred_check_branch
      %50 = sbr.rel (0) target = $region17
    $region16: #{tpu_custom_call.1} parent=1 // pred_region
      %s52 = ssub.s32 16, 16
      %53 = vsyncadd [#allocation5], %s52
      %s55 = sshll.u32 %s3, 4
      %s56 = int_to_ptr.vmem [resolvable:$true] %s55
      %58 = dma.vmem_to_smem %s56, 16, [#allocation9], [#allocation5]
    $region17: #{tpu_custom_call.1} parent=1 // pred_fallthru
      _
    // Predicated region
    $region18: #{tpu_custom_call.1} parent=1 // pred_check
      _
    $region19: #{tpu_custom_call.1} parent=1 // pred_check_branch
      %60 = sbr.rel (0) target = $region21
    $region20: #{tpu_custom_call.1} parent=1 // pred_region
      %s62 = ssub.s32 16, 16
      %63 = vsyncadd [#allocation11], %s62
      %s65 = sshll.u32 %s4, 4
      %s66 = int_to_ptr.vmem [resolvable:$true] %s65
      %68 = dma.vmem_to_smem %s66, 16, [#allocation10], [#allocation11]
    $region21: #{tpu_custom_call.1} parent=1 // pred_fallthru
      _
    // Predicated region
    $region22: #{tpu_custom_call.1} parent=1 // pred_check
      _
    $region23: #{tpu_custom_call.1} parent=1 // pred_check_branch
      %70 = sbr.rel (0) target = $region25
    $region24: #{tpu_custom_call.1} parent=1 // pred_region
      %71 = dma.done [#allocation3], 768
    $region25: #{tpu_custom_call.1} parent=1 // pred_fallthru
      _
    // Predicated region
    $region26: #{tpu_custom_call.1} parent=1 // pred_check
      _
    $region27: #{tpu_custom_call.1} parent=1 // pred_check_branch
      %73 = sbr.rel (0) target = $region29
    $region28: #{tpu_custom_call.1} parent=1 // pred_region
      %74 = dma.done [#allocation7], 256
    $region29: #{tpu_custom_call.1} parent=1 // pred_fallthru
      _
    // Predicated region
    $region30: #{tpu_custom_call.1} parent=1 // pred_check
      _
    $region31: #{tpu_custom_call.1} parent=1 // pred_check_branch
      %76 = sbr.rel (0) target = $region33
    $region32: #{tpu_custom_call.1} parent=1 // pred_region
      %77 = dma.done [#allocation7], 128
    $region33: #{tpu_custom_call.1} parent=1 // pred_fallthru
      _
    // Predicated region
    $region34: #{tpu_custom_call.1} parent=1 // pred_check
      _
    $region35: #{tpu_custom_call.1} parent=1 // pred_check_branch
      %79 = sbr.rel (0) target = $region37
    $region36: #{tpu_custom_call.1} parent=1 // pred_region
      %80 = dma.done [#allocation5], 16
    $region37: #{tpu_custom_call.1} parent=1 // pred_fallthru
      _
    // Predicated region
    $region38: #{tpu_custom_call.1} parent=1 // pred_check
      _
    $region39: #{tpu_custom_call.1} parent=1 // pred_check_branch
      %82 = sbr.rel (0) target = $region41
    $region40: #{tpu_custom_call.1} parent=1 // pred_region
      %83 = dma.done [#allocation11], 16
    $region41: #{tpu_custom_call.1} parent=1 // pred_fallthru
      _
    %84 = sfence
    %v85 = vld [vmem:[#allocation6] sm:$0xff]
    %v86 = vld [vmem:[#allocation6 + $0x8] sm:$0xff]
    %v87 = vsub.f32 1.0, %v85
    %v88 = vsub.f32 1.0, %v86
    %v89 = vld [vmem:[#allocation8] sm:$0xff]
    %v90 = vlaneseq
    %v91 = vshrl.u32 %v90, 7
    %v92 = vadd.s32 %v91, 8
    %v93 = vlaneseq
    %v94 = vand.u32 %v93, 127
    %vm95 = vcmp.eq.s32.totalorder %v91, 0
    %vm96 = vcmp.eq.s32.totalorder %v92, 0
    %vm97 = vcmp.eq.s32.totalorder %v91, 15
    %vm98 = vcmp.eq.s32.totalorder %v92, 15
    %vm99 = vcmp.eq.s32.totalorder %v94, 0
    %vm100 = vcmp.eq.s32.totalorder %v94, 127
    %s101 = sld [smem:[#allocation10]]
    %v102 = vstv %s101
    %s103 = sld [smem:[#allocation10 + $0x1]]
    %v104 = vstv %s103
    %s105 = sld [smem:[#allocation10 + $0x2]]
    %v106 = vstv %s105
    %v107 = vld [vmem:[#allocation2] sm:$0xff]
    %v108 = vld [vmem:[#allocation2 + $0x8] sm:$0xff]
    %v109 = vmul.f32 %v107, %v87
    %v110 = vmul.f32 %v108, %v88
    %v111 = vsub.f32 1.0, %v89
    %v113 = vrot.slane %v111, 3
    %v115 = vmul.f32 %v89, %v113
    %v116 = vlaneseq
    %v117 = vshrl.u32 %v116, 7
    %v118 = vsub.s32 0, %v117
    %v119 = vrot.slane %v115, %v118
    %v120 = vrot.slane %v109, 7
    %v121 = vrot.slane %v110, 7
    %vm122 = vcmp.lt.s32.totalorder %v91, 1
    %v123 = vsel %vm122, %v120, %v121
    %v124 = vsel %vm122, %v121, %v120
    %v125 = vsel %vm95, %v119, %v124
    %v126 = vsel %vm96, %v119, %v123
    %v127 = vlaneseq
    %v128 = vshrl.u32 %v127, 7
    %v129 = vsub.s32 4, %v128
    %v130 = vrot.slane %v115, %v129
    %v131 = vrot.slane %v109, 1
    %v132 = vrot.slane %v110, 1
    %vm133 = vcmp.lt.s32.totalorder %v91, 7
    %v134 = vsel %vm133, %v131, %v132
    %v135 = vsel %vm133, %v132, %v131
    %v136 = vsel %vm97, %v130, %v134
    %v137 = vsel %vm98, %v130, %v135
    %138 = vrot.lane.b32.xlu0 %v125, 1
    %v139 = vpop.permute.xlu0 %138
    %140 = vrot.lane.b32.xlu0 %v126, 1
    %v141 = vpop.permute.xlu0 %140
    %v142 = vsel %vm99, 0.0, %v139
    %v143 = vsel %vm99, 0.0, %v141
    %144 = vrot.lane.b32.xlu0 %v125, 127
    %v145 = vpop.permute.xlu0 %144
    %146 = vrot.lane.b32.xlu0 %v126, 127
    %v147 = vpop.permute.xlu0 %146
    %v148 = vsel %vm100, 0.0, %v145
    %v149 = vsel %vm100, 0.0, %v147
    %s150 = sld [smem:[#allocation9]]
    %v151 = vstv %s150
    %v152 = vmul.f32 %v151, %v142
    %v153 = vmul.f32 %v151, %v143
    %v154 = vadd.f32 %v102, %v152
    %v155 = vadd.f32 %v102, %v153
    %s156 = sld [smem:[#allocation9 + $0x24]]
    %v157 = vstv %s156
    %v158 = vmul.f32 %v157, %v142
    %v159 = vmul.f32 %v157, %v143
    %v160 = vadd.f32 %v104, %v158
    %v161 = vadd.f32 %v104, %v159
    %s162 = sld [smem:[#allocation9 + $0x48]]
    %v163 = vstv %s162
    %v164 = vmul.f32 %v163, %v142
    %v165 = vmul.f32 %v163, %v143
    %v166 = vadd.f32 %v106, %v164
    %v167 = vadd.f32 %v106, %v165
    %s168 = sld [smem:[#allocation9 + $0x1]]
    %v169 = vstv %s168
    %v170 = vmul.f32 %v169, %v125
    %v171 = vmul.f32 %v169, %v126
    %v172 = vadd.f32 %v154, %v170
    %v173 = vadd.f32 %v155, %v171
    %s174 = sld [smem:[#allocation9 + $0x25]]
    %v175 = vstv %s174
    %v176 = vmul.f32 %v175, %v125
    %v177 = vmul.f32 %v175, %v126
    %v178 = vadd.f32 %v160, %v176
    %v179 = vadd.f32 %v161, %v177
    %s180 = sld [smem:[#allocation9 + $0x49]]
    %v181 = vstv %s180
    %v182 = vmul.f32 %v181, %v125
    %v183 = vmul.f32 %v181, %v126
    %v184 = vadd.f32 %v166, %v182
    %v185 = vadd.f32 %v167, %v183
    %s186 = sld [smem:[#allocation9 + $0x2]]
    %v187 = vstv %s186
    %v188 = vmul.f32 %v187, %v148
    %v189 = vmul.f32 %v187, %v149
    %v190 = vadd.f32 %v172, %v188
    %v191 = vadd.f32 %v173, %v189
    %s192 = sld [smem:[#allocation9 + $0x26]]
    %v193 = vstv %s192
    %v194 = vmul.f32 %v193, %v148
    %v195 = vmul.f32 %v193, %v149
    %v196 = vadd.f32 %v178, %v194
    %v197 = vadd.f32 %v179, %v195
    %s198 = sld [smem:[#allocation9 + $0x4a]]
    %v199 = vstv %s198
    %v200 = vmul.f32 %v199, %v148
    %v201 = vmul.f32 %v199, %v149
    %v202 = vadd.f32 %v184, %v200
    %v203 = vadd.f32 %v185, %v201
    %204 = vrot.lane.b32.xlu0 %v109, 1
    %v205 = vpop.permute.xlu0 %204
    %206 = vrot.lane.b32.xlu0 %v110, 1
    %v207 = vpop.permute.xlu0 %206
    %v208 = vsel %vm99, 0.0, %v205
    %v209 = vsel %vm99, 0.0, %v207
    %210 = vrot.lane.b32.xlu0 %v109, 127
    %v211 = vpop.permute.xlu0 %210
    %212 = vrot.lane.b32.xlu0 %v110, 127
    %v213 = vpop.permute.xlu0 %212
    %v214 = vsel %vm100, 0.0, %v211
    %v215 = vsel %vm100, 0.0, %v213
    %s216 = sld [smem:[#allocation9 + $0x3]]
    %v217 = vstv %s216
    %v218 = vmul.f32 %v217, %v208
    %v219 = vmul.f32 %v217, %v209
    %v220 = vadd.f32 %v190, %v218
    %v221 = vadd.f32 %v191, %v219
    %s222 = sld [smem:[#allocation9 + $0x27]]
    %v223 = vstv %s222
    %v224 = vmul.f32 %v223, %v208
    %v225 = vmul.f32 %v223, %v209
    %v226 = vadd.f32 %v196, %v224
    %v227 = vadd.f32 %v197, %v225
    %s228 = sld [smem:[#allocation9 + $0x4b]]
    %v229 = vstv %s228
    %v230 = vmul.f32 %v229, %v208
    %v231 = vmul.f32 %v229, %v209
    %v232 = vadd.f32 %v202, %v230
    %v233 = vadd.f32 %v203, %v231
    %s234 = sld [smem:[#allocation9 + $0x4]]
    %v235 = vstv %s234
    %v236 = vmul.f32 %v235, %v109
    %v237 = vmul.f32 %v235, %v110
    %v238 = vadd.f32 %v220, %v236
    %v239 = vadd.f32 %v221, %v237
    %s240 = sld [smem:[#allocation9 + $0x28]]
    %v241 = vstv %s240
    %v242 = vmul.f32 %v241, %v109
    %v243 = vmul.f32 %v241, %v110
    %v244 = vadd.f32 %v226, %v242
    %v245 = vadd.f32 %v227, %v243
    %s246 = sld [smem:[#allocation9 + $0x4c]]
    %v247 = vstv %s246
    %v248 = vmul.f32 %v247, %v109
    %v249 = vmul.f32 %v247, %v110
    %v250 = vadd.f32 %v232, %v248
    %v251 = vadd.f32 %v233, %v249
    %s252 = sld [smem:[#allocation9 + $0x5]]
    %v253 = vstv %s252
    %v254 = vmul.f32 %v253, %v214
    %v255 = vmul.f32 %v253, %v215
    %v256 = vadd.f32 %v238, %v254
    %v257 = vadd.f32 %v239, %v255
    %s258 = sld [smem:[#allocation9 + $0x29]]
    %v259 = vstv %s258
    %v260 = vmul.f32 %v259, %v214
    %v261 = vmul.f32 %v259, %v215
    %v262 = vadd.f32 %v244, %v260
    %v263 = vadd.f32 %v245, %v261
    %s264 = sld [smem:[#allocation9 + $0x4d]]
    %v265 = vstv %s264
    %v266 = vmul.f32 %v265, %v214
    %v267 = vmul.f32 %v265, %v215
    %v268 = vadd.f32 %v250, %v266
    %v269 = vadd.f32 %v251, %v267
    %270 = vrot.lane.b32.xlu0 %v136, 1
    %v271 = vpop.permute.xlu0 %270
    %272 = vrot.lane.b32.xlu0 %v137, 1
    %v273 = vpop.permute.xlu0 %272
    %v274 = vsel %vm99, 0.0, %v271
    %v275 = vsel %vm99, 0.0, %v273
    %276 = vrot.lane.b32.xlu0 %v136, 127
    %v277 = vpop.permute.xlu0 %276
    %278 = vrot.lane.b32.xlu0 %v137, 127
    %v279 = vpop.permute.xlu0 %278
    %v280 = vsel %vm100, 0.0, %v277
    %v281 = vsel %vm100, 0.0, %v279
    %s282 = sld [smem:[#allocation9 + $0x6]]
    %v283 = vstv %s282
    %v284 = vmul.f32 %v283, %v274
    %v285 = vmul.f32 %v283, %v275
    %v286 = vadd.f32 %v256, %v284
    %v287 = vadd.f32 %v257, %v285
    %s288 = sld [smem:[#allocation9 + $0x2a]]
    %v289 = vstv %s288
    %v290 = vmul.f32 %v289, %v274
    %v291 = vmul.f32 %v289, %v275
    %v292 = vadd.f32 %v262, %v290
    %v293 = vadd.f32 %v263, %v291
    %s294 = sld [smem:[#allocation9 + $0x4e]]
    %v295 = vstv %s294
    %v296 = vmul.f32 %v295, %v274
    %v297 = vmul.f32 %v295, %v275
    %v298 = vadd.f32 %v268, %v296
    %v299 = vadd.f32 %v269, %v297
    %s300 = sld [smem:[#allocation9 + $0x7]]
    %v301 = vstv %s300
    %v302 = vmul.f32 %v301, %v136
    %v303 = vmul.f32 %v301, %v137
    %v304 = vadd.f32 %v286, %v302
    %v305 = vadd.f32 %v287, %v303
    %s306 = sld [smem:[#allocation9 + $0x2b]]
    %v307 = vstv %s306
    %v308 = vmul.f32 %v307, %v136
    %v309 = vmul.f32 %v307, %v137
    %v310 = vadd.f32 %v292, %v308
    %v311 = vadd.f32 %v293, %v309
    %s312 = sld [smem:[#allocation9 + $0x4f]]
    %v313 = vstv %s312
    %v314 = vmul.f32 %v313, %v136
    %v315 = vmul.f32 %v313, %v137
    %v316 = vadd.f32 %v298, %v314
    %v317 = vadd.f32 %v299, %v315
    %s318 = sld [smem:[#allocation9 + $0x8]]
    %v319 = vstv %s318
    %v320 = vmul.f32 %v319, %v280
    %v321 = vmul.f32 %v319, %v281
    %v322 = vadd.f32 %v304, %v320
    %v323 = vadd.f32 %v305, %v321
    %s324 = sld [smem:[#allocation9 + $0x2c]]
    %v325 = vstv %s324
    %v326 = vmul.f32 %v325, %v280
    %v327 = vmul.f32 %v325, %v281
    %v328 = vadd.f32 %v310, %v326
    %v329 = vadd.f32 %v311, %v327
    %s330 = sld [smem:[#allocation9 + $0x50]]
    %v331 = vstv %s330
    %v332 = vmul.f32 %v331, %v280
    %v333 = vmul.f32 %v331, %v281
    %v334 = vadd.f32 %v316, %v332
    %v335 = vadd.f32 %v317, %v333
    %s336 = scalar_lea.vmem [#allocation2], 16
    %v337 = vld [vmem:[%s336] sm:$0xff]
    %v338 = vld [vmem:[%s336 + $0x8] sm:$0xff]
    %v339 = vmul.f32 %v337, %v87
    %v340 = vmul.f32 %v338, %v88
    %v341 = vrot.slane %v111, 2
    %v343 = vmul.f32 %v89, %v341
    %v344 = vlaneseq
    %v345 = vshrl.u32 %v344, 7
    %v346 = vsub.s32 1, %v345
    %v347 = vrot.slane %v343, %v346
    %v348 = vrot.slane %v339, 7
    %v349 = vrot.slane %v340, 7
    %v350 = vsel %vm122, %v348, %v349
    %v351 = vsel %vm122, %v349, %v348
    %v352 = vsel %vm95, %v347, %v351
    %v353 = vsel %vm96, %v347, %v350
    %v354 = vlaneseq
    %v355 = vshrl.u32 %v354, 7
    %v356 = vsub.s32 5, %v355
    %v357 = vrot.slane %v343, %v356
    %v358 = vrot.slane %v339, 1
    %v359 = vrot.slane %v340, 1
    %v360 = vsel %vm133, %v358, %v359
    %v361 = vsel %vm133, %v359, %v358
    %v362 = vsel %vm97, %v357, %v360
    %v363 = vsel %vm98, %v357, %v361
    %364 = vrot.lane.b32.xlu0 %v352, 1
    %v365 = vpop.permute.xlu0 %364
    %366 = vrot.lane.b32.xlu0 %v353, 1
    %v367 = vpop.permute.xlu0 %366
    %v368 = vsel %vm99, 0.0, %v365
    %v369 = vsel %vm99, 0.0, %v367
    %370 = vrot.lane.b32.xlu0 %v352, 127
    %v371 = vpop.permute.xlu0 %370
    %372 = vrot.lane.b32.xlu0 %v353, 127
    %v373 = vpop.permute.xlu0 %372
    %v374 = vsel %vm100, 0.0, %v371
    %v375 = vsel %vm100, 0.0, %v373
    %s376 = sld [smem:[#allocation9 + $0x9]]
    %v377 = vstv %s376
    %v378 = vmul.f32 %v377, %v368
    %v379 = vmul.f32 %v377, %v369
    %v380 = vadd.f32 %v322, %v378
    %v381 = vadd.f32 %v323, %v379
    %s382 = sld [smem:[#allocation9 + $0x2d]]
    %v383 = vstv %s382
    %v384 = vmul.f32 %v383, %v368
    %v385 = vmul.f32 %v383, %v369
    %v386 = vadd.f32 %v328, %v384
    %v387 = vadd.f32 %v329, %v385
    %s388 = sld [smem:[#allocation9 + $0x51]]
    %v389 = vstv %s388
    %v390 = vmul.f32 %v389, %v368
    %v391 = vmul.f32 %v389, %v369
    %v392 = vadd.f32 %v334, %v390
    %v393 = vadd.f32 %v335, %v391
    %s394 = sld [smem:[#allocation9 + $0xa]]
    %v395 = vstv %s394
    %v396 = vmul.f32 %v395, %v352
    %v397 = vmul.f32 %v395, %v353
    %v398 = vadd.f32 %v380, %v396
    %v399 = vadd.f32 %v381, %v397
    %s400 = sld [smem:[#allocation9 + $0x2e]]
    %v401 = vstv %s400
    %v402 = vmul.f32 %v401, %v352
    %v403 = vmul.f32 %v401, %v353
    %v404 = vadd.f32 %v386, %v402
    %v405 = vadd.f32 %v387, %v403
    %s406 = sld [smem:[#allocation9 + $0x52]]
    %v407 = vstv %s406
    %v408 = vmul.f32 %v407, %v352
    %v409 = vmul.f32 %v407, %v353
    %v410 = vadd.f32 %v392, %v408
    %v411 = vadd.f32 %v393, %v409
    %s412 = sld [smem:[#allocation9 + $0xb]]
    %v413 = vstv %s412
    %v414 = vmul.f32 %v413, %v374
    %v415 = vmul.f32 %v413, %v375
    %v416 = vadd.f32 %v398, %v414
    %v417 = vadd.f32 %v399, %v415
    %s418 = sld [smem:[#allocation9 + $0x2f]]
    %v419 = vstv %s418
    %v420 = vmul.f32 %v419, %v374
    %v421 = vmul.f32 %v419, %v375
    %v422 = vadd.f32 %v404, %v420
    %v423 = vadd.f32 %v405, %v421
    %s424 = sld [smem:[#allocation9 + $0x53]]
    %v425 = vstv %s424
    %v426 = vmul.f32 %v425, %v374
    %v427 = vmul.f32 %v425, %v375
    %v428 = vadd.f32 %v410, %v426
    %v429 = vadd.f32 %v411, %v427
    %430 = vrot.lane.b32.xlu0 %v339, 1
    %v431 = vpop.permute.xlu0 %430
    %432 = vrot.lane.b32.xlu0 %v340, 1
    %v433 = vpop.permute.xlu0 %432
    %v434 = vsel %vm99, 0.0, %v431
    %v435 = vsel %vm99, 0.0, %v433
    %436 = vrot.lane.b32.xlu0 %v339, 127
    %v437 = vpop.permute.xlu0 %436
    %438 = vrot.lane.b32.xlu0 %v340, 127
    %v439 = vpop.permute.xlu0 %438
    %v440 = vsel %vm100, 0.0, %v437
    %v441 = vsel %vm100, 0.0, %v439
    %s442 = sld [smem:[#allocation9 + $0xc]]
    %v443 = vstv %s442
    %v444 = vmul.f32 %v443, %v434
    %v445 = vmul.f32 %v443, %v435
    %v446 = vadd.f32 %v416, %v444
    %v447 = vadd.f32 %v417, %v445
    %s448 = sld [smem:[#allocation9 + $0x30]]
    %v449 = vstv %s448
    %v450 = vmul.f32 %v449, %v434
    %v451 = vmul.f32 %v449, %v435
    %v452 = vadd.f32 %v422, %v450
    %v453 = vadd.f32 %v423, %v451
    %s454 = sld [smem:[#allocation9 + $0x54]]
    %v455 = vstv %s454
    %v456 = vmul.f32 %v455, %v434
    %v457 = vmul.f32 %v455, %v435
    %v458 = vadd.f32 %v428, %v456
    %v459 = vadd.f32 %v429, %v457
    %s460 = sld [smem:[#allocation9 + $0xd]]
    %v461 = vstv %s460
    %v462 = vmul.f32 %v461, %v339
    %v463 = vmul.f32 %v461, %v340
    %v464 = vadd.f32 %v446, %v462
    %v465 = vadd.f32 %v447, %v463
    %s466 = sld [smem:[#allocation9 + $0x31]]
    %v467 = vstv %s466
    %v468 = vmul.f32 %v467, %v339
    %v469 = vmul.f32 %v467, %v340
    %v470 = vadd.f32 %v452, %v468
    %v471 = vadd.f32 %v453, %v469
    %s472 = sld [smem:[#allocation9 + $0x55]]
    %v473 = vstv %s472
    %v474 = vmul.f32 %v473, %v339
    %v475 = vmul.f32 %v473, %v340
    %v476 = vadd.f32 %v458, %v474
    %v477 = vadd.f32 %v459, %v475
    %s478 = sld [smem:[#allocation9 + $0xe]]
    %v479 = vstv %s478
    %v480 = vmul.f32 %v479, %v440
    %v481 = vmul.f32 %v479, %v441
    %v482 = vadd.f32 %v464, %v480
    %v483 = vadd.f32 %v465, %v481
    %s484 = sld [smem:[#allocation9 + $0x32]]
    %v485 = vstv %s484
    %v486 = vmul.f32 %v485, %v440
    %v487 = vmul.f32 %v485, %v441
    %v488 = vadd.f32 %v470, %v486
    %v489 = vadd.f32 %v471, %v487
    %s490 = sld [smem:[#allocation9 + $0x56]]
    %v491 = vstv %s490
    %v492 = vmul.f32 %v491, %v440
    %v493 = vmul.f32 %v491, %v441
    %v494 = vadd.f32 %v476, %v492
    %v495 = vadd.f32 %v477, %v493
    %496 = vrot.lane.b32.xlu0 %v362, 1
    %v497 = vpop.permute.xlu0 %496
    %498 = vrot.lane.b32.xlu0 %v363, 1
    %v499 = vpop.permute.xlu0 %498
    %v500 = vsel %vm99, 0.0, %v497
    %v501 = vsel %vm99, 0.0, %v499
    %502 = vrot.lane.b32.xlu0 %v362, 127
    %v503 = vpop.permute.xlu0 %502
    %504 = vrot.lane.b32.xlu0 %v363, 127
    %v505 = vpop.permute.xlu0 %504
    %v506 = vsel %vm100, 0.0, %v503
    %v507 = vsel %vm100, 0.0, %v505
    %s508 = sld [smem:[#allocation9 + $0xf]]
    %v509 = vstv %s508
    %v510 = vmul.f32 %v509, %v500
    %v511 = vmul.f32 %v509, %v501
    %v512 = vadd.f32 %v482, %v510
    %v513 = vadd.f32 %v483, %v511
    %s514 = sld [smem:[#allocation9 + $0x33]]
    %v515 = vstv %s514
    %v516 = vmul.f32 %v515, %v500
    %v517 = vmul.f32 %v515, %v501
    %v518 = vadd.f32 %v488, %v516
    %v519 = vadd.f32 %v489, %v517
    %s520 = sld [smem:[#allocation9 + $0x57]]
    %v521 = vstv %s520
    %v522 = vmul.f32 %v521, %v500
    %v523 = vmul.f32 %v521, %v501
    %v524 = vadd.f32 %v494, %v522
    %v525 = vadd.f32 %v495, %v523
    %s526 = sld [smem:[#allocation9 + $0x10]]
    %v527 = vstv %s526
    %v528 = vmul.f32 %v527, %v362
    %v529 = vmul.f32 %v527, %v363
    %v530 = vadd.f32 %v512, %v528
    %v531 = vadd.f32 %v513, %v529
    %s532 = sld [smem:[#allocation9 + $0x34]]
    %v533 = vstv %s532
    %v534 = vmul.f32 %v533, %v362
    %v535 = vmul.f32 %v533, %v363
    %v536 = vadd.f32 %v518, %v534
    %v537 = vadd.f32 %v519, %v535
    %s538 = sld [smem:[#allocation9 + $0x58]]
    %v539 = vstv %s538
    %v540 = vmul.f32 %v539, %v362
    %v541 = vmul.f32 %v539, %v363
    %v542 = vadd.f32 %v524, %v540
    %v543 = vadd.f32 %v525, %v541
    %s544 = sld [smem:[#allocation9 + $0x11]]
    %v545 = vstv %s544
    %v546 = vmul.f32 %v545, %v506
    %v547 = vmul.f32 %v545, %v507
    %v548 = vadd.f32 %v530, %v546
    %v549 = vadd.f32 %v531, %v547
    %s550 = sld [smem:[#allocation9 + $0x35]]
    %v551 = vstv %s550
    %v552 = vmul.f32 %v551, %v506
    %v553 = vmul.f32 %v551, %v507
    %v554 = vadd.f32 %v536, %v552
    %v555 = vadd.f32 %v537, %v553
    %s556 = sld [smem:[#allocation9 + $0x59]]
    %v557 = vstv %s556
    %v558 = vmul.f32 %v557, %v506
    %v559 = vmul.f32 %v557, %v507
    %v560 = vadd.f32 %v542, %v558
    %v561 = vadd.f32 %v543, %v559
    %s562 = scalar_lea.vmem [#allocation2], 32
    %v563 = vld [vmem:[%s562] sm:$0xff]
    %v564 = vld [vmem:[%s562 + $0x8] sm:$0xff]
    %v565 = vmul.f32 %v563, %v87
    %v566 = vmul.f32 %v564, %v88
    %v567 = vrot.slane %v111, 1
    %v569 = vmul.f32 %v89, %v567
    %v570 = vlaneseq
    %v571 = vshrl.u32 %v570, 7
    %v572 = vsub.s32 2, %v571
    %v573 = vrot.slane %v569, %v572
    %v574 = vrot.slane %v565, 7
    %v575 = vrot.slane %v566, 7
    %v576 = vsel %vm122, %v574, %v575
    %v577 = vsel %vm122, %v575, %v574
    %v578 = vsel %vm95, %v573, %v577
    %v579 = vsel %vm96, %v573, %v576
    %v580 = vlaneseq
    %v581 = vshrl.u32 %v580, 7
    %v582 = vsub.s32 6, %v581
    %v583 = vrot.slane %v569, %v582
    %v584 = vrot.slane %v565, 1
    %v585 = vrot.slane %v566, 1
    %v586 = vsel %vm133, %v584, %v585
    %v587 = vsel %vm133, %v585, %v584
    %v588 = vsel %vm97, %v583, %v586
    %v589 = vsel %vm98, %v583, %v587
    %590 = vrot.lane.b32.xlu0 %v578, 1
    %v591 = vpop.permute.xlu0 %590
    %592 = vrot.lane.b32.xlu0 %v579, 1
    %v593 = vpop.permute.xlu0 %592
    %v594 = vsel %vm99, 0.0, %v591
    %v595 = vsel %vm99, 0.0, %v593
    %596 = vrot.lane.b32.xlu0 %v578, 127
    %v597 = vpop.permute.xlu0 %596
    %598 = vrot.lane.b32.xlu0 %v579, 127
    %v599 = vpop.permute.xlu0 %598
    %v600 = vsel %vm100, 0.0, %v597
    %v601 = vsel %vm100, 0.0, %v599
    %s602 = sld [smem:[#allocation9 + $0x12]]
    %v603 = vstv %s602
    %v604 = vmul.f32 %v603, %v594
    %v605 = vmul.f32 %v603, %v595
    %v606 = vadd.f32 %v548, %v604
    %v607 = vadd.f32 %v549, %v605
    %s608 = sld [smem:[#allocation9 + $0x36]]
    %v609 = vstv %s608
    %v610 = vmul.f32 %v609, %v594
    %v611 = vmul.f32 %v609, %v595
    %v612 = vadd.f32 %v554, %v610
    %v613 = vadd.f32 %v555, %v611
    %s614 = sld [smem:[#allocation9 + $0x5a]]
    %v615 = vstv %s614
    %v616 = vmul.f32 %v615, %v594
    %v617 = vmul.f32 %v615, %v595
    %v618 = vadd.f32 %v560, %v616
    %v619 = vadd.f32 %v561, %v617
    %s620 = sld [smem:[#allocation9 + $0x13]]
    %v621 = vstv %s620
    %v622 = vmul.f32 %v621, %v578
    %v623 = vmul.f32 %v621, %v579
    %v624 = vadd.f32 %v606, %v622
    %v625 = vadd.f32 %v607, %v623
    %s626 = sld [smem:[#allocation9 + $0x37]]
    %v627 = vstv %s626
    %v628 = vmul.f32 %v627, %v578
    %v629 = vmul.f32 %v627, %v579
    %v630 = vadd.f32 %v612, %v628
    %v631 = vadd.f32 %v613, %v629
    %s632 = sld [smem:[#allocation9 + $0x5b]]
    %v633 = vstv %s632
    %v634 = vmul.f32 %v633, %v578
    %v635 = vmul.f32 %v633, %v579
    %v636 = vadd.f32 %v618, %v634
    %v637 = vadd.f32 %v619, %v635
    %s638 = sld [smem:[#allocation9 + $0x14]]
    %v639 = vstv %s638
    %v640 = vmul.f32 %v639, %v600
    %v641 = vmul.f32 %v639, %v601
    %v642 = vadd.f32 %v624, %v640
    %v643 = vadd.f32 %v625, %v641
    %s644 = sld [smem:[#allocation9 + $0x38]]
    %v645 = vstv %s644
    %v646 = vmul.f32 %v645, %v600
    %v647 = vmul.f32 %v645, %v601
    %v648 = vadd.f32 %v630, %v646
    %v649 = vadd.f32 %v631, %v647
    %s650 = sld [smem:[#allocation9 + $0x5c]]
    %v651 = vstv %s650
    %v652 = vmul.f32 %v651, %v600
    %v653 = vmul.f32 %v651, %v601
    %v654 = vadd.f32 %v636, %v652
    %v655 = vadd.f32 %v637, %v653
    %656 = vrot.lane.b32.xlu0 %v565, 1
    %v657 = vpop.permute.xlu0 %656
    %658 = vrot.lane.b32.xlu0 %v566, 1
    %v659 = vpop.permute.xlu0 %658
    %v660 = vsel %vm99, 0.0, %v657
    %v661 = vsel %vm99, 0.0, %v659
    %662 = vrot.lane.b32.xlu0 %v565, 127
    %v663 = vpop.permute.xlu0 %662
    %664 = vrot.lane.b32.xlu0 %v566, 127
    %v665 = vpop.permute.xlu0 %664
    %v666 = vsel %vm100, 0.0, %v663
    %v667 = vsel %vm100, 0.0, %v665
    %s668 = sld [smem:[#allocation9 + $0x15]]
    %v669 = vstv %s668
    %v670 = vmul.f32 %v669, %v660
    %v671 = vmul.f32 %v669, %v661
    %v672 = vadd.f32 %v642, %v670
    %v673 = vadd.f32 %v643, %v671
    %s674 = sld [smem:[#allocation9 + $0x39]]
    %v675 = vstv %s674
    %v676 = vmul.f32 %v675, %v660
    %v677 = vmul.f32 %v675, %v661
    %v678 = vadd.f32 %v648, %v676
    %v679 = vadd.f32 %v649, %v677
    %s680 = sld [smem:[#allocation9 + $0x5d]]
    %v681 = vstv %s680
    %v682 = vmul.f32 %v681, %v660
    %v683 = vmul.f32 %v681, %v661
    %v684 = vadd.f32 %v654, %v682
    %v685 = vadd.f32 %v655, %v683
    %s686 = sld [smem:[#allocation9 + $0x16]]
    %v687 = vstv %s686
    %v688 = vmul.f32 %v687, %v565
    %v689 = vmul.f32 %v687, %v566
    %v690 = vadd.f32 %v672, %v688
    %v691 = vadd.f32 %v673, %v689
    %s692 = sld [smem:[#allocation9 + $0x3a]]
    %v693 = vstv %s692
    %v694 = vmul.f32 %v693, %v565
    %v695 = vmul.f32 %v693, %v566
    %v696 = vadd.f32 %v678, %v694
    %v697 = vadd.f32 %v679, %v695
    %s698 = sld [smem:[#allocation9 + $0x5e]]
    %v699 = vstv %s698
    %v700 = vmul.f32 %v699, %v565
    %v701 = vmul.f32 %v699, %v566
    %v702 = vadd.f32 %v684, %v700
    %v703 = vadd.f32 %v685, %v701
    %s704 = sld [smem:[#allocation9 + $0x17]]
    %v705 = vstv %s704
    %v706 = vmul.f32 %v705, %v666
    %v707 = vmul.f32 %v705, %v667
    %v708 = vadd.f32 %v690, %v706
    %v709 = vadd.f32 %v691, %v707
    %s710 = sld [smem:[#allocation9 + $0x3b]]
    %v711 = vstv %s710
    %v712 = vmul.f32 %v711, %v666
    %v713 = vmul.f32 %v711, %v667
    %v714 = vadd.f32 %v696, %v712
    %v715 = vadd.f32 %v697, %v713
    %s716 = sld [smem:[#allocation9 + $0x5f]]
    %v717 = vstv %s716
    %v718 = vmul.f32 %v717, %v666
    %v719 = vmul.f32 %v717, %v667
    %v720 = vadd.f32 %v702, %v718
    %v721 = vadd.f32 %v703, %v719
    %722 = vrot.lane.b32.xlu0 %v588, 1
    %v723 = vpop.permute.xlu0 %722
    %724 = vrot.lane.b32.xlu0 %v589, 1
    %v725 = vpop.permute.xlu0 %724
    %v726 = vsel %vm99, 0.0, %v723
    %v727 = vsel %vm99, 0.0, %v725
    %728 = vrot.lane.b32.xlu0 %v588, 127
    %v729 = vpop.permute.xlu0 %728
    %730 = vrot.lane.b32.xlu0 %v589, 127
    %v731 = vpop.permute.xlu0 %730
    %v732 = vsel %vm100, 0.0, %v729
    %v733 = vsel %vm100, 0.0, %v731
    %s734 = sld [smem:[#allocation9 + $0x18]]
    %v735 = vstv %s734
    %v736 = vmul.f32 %v735, %v726
    %v737 = vmul.f32 %v735, %v727
    %v738 = vadd.f32 %v708, %v736
    %v739 = vadd.f32 %v709, %v737
    %s740 = sld [smem:[#allocation9 + $0x3c]]
    %v741 = vstv %s740
    %v742 = vmul.f32 %v741, %v726
    %v743 = vmul.f32 %v741, %v727
    %v744 = vadd.f32 %v714, %v742
    %v745 = vadd.f32 %v715, %v743
    %s746 = sld [smem:[#allocation9 + $0x60]]
    %v747 = vstv %s746
    %v748 = vmul.f32 %v747, %v726
    %v749 = vmul.f32 %v747, %v727
    %v750 = vadd.f32 %v720, %v748
    %v751 = vadd.f32 %v721, %v749
    %s752 = sld [smem:[#allocation9 + $0x19]]
    %v753 = vstv %s752
    %v754 = vmul.f32 %v753, %v588
    %v755 = vmul.f32 %v753, %v589
    %v756 = vadd.f32 %v738, %v754
    %v757 = vadd.f32 %v739, %v755
    %s758 = sld [smem:[#allocation9 + $0x3d]]
    %v759 = vstv %s758
    %v760 = vmul.f32 %v759, %v588
    %v761 = vmul.f32 %v759, %v589
    %v762 = vadd.f32 %v744, %v760
    %v763 = vadd.f32 %v745, %v761
    %s764 = sld [smem:[#allocation9 + $0x61]]
    %v765 = vstv %s764
    %v766 = vmul.f32 %v765, %v588
    %v767 = vmul.f32 %v765, %v589
    %v768 = vadd.f32 %v750, %v766
    %v769 = vadd.f32 %v751, %v767
    %s770 = sld [smem:[#allocation9 + $0x1a]]
    %v771 = vstv %s770
    %v772 = vmul.f32 %v771, %v732
    %v773 = vmul.f32 %v771, %v733
    %v774 = vadd.f32 %v756, %v772
    %v775 = vadd.f32 %v757, %v773
    %s776 = sld [smem:[#allocation9 + $0x3e]]
    %v777 = vstv %s776
    %v778 = vmul.f32 %v777, %v732
    %v779 = vmul.f32 %v777, %v733
    %v780 = vadd.f32 %v762, %v778
    %v781 = vadd.f32 %v763, %v779
    %s782 = sld [smem:[#allocation9 + $0x62]]
    %v783 = vstv %s782
    %v784 = vmul.f32 %v783, %v732
    %v785 = vmul.f32 %v783, %v733
    %v786 = vadd.f32 %v768, %v784
    %v787 = vadd.f32 %v769, %v785
    %v788 = vlaneseq
    %v789 = vshrl.u32 %v788, 7
    %v790 = vsub.s32 3, %v789
    %v791 = vrot.slane %v89, %v790
    %v792 = vrot.slane %v85, 7
    %v793 = vrot.slane %v86, 7
    %v794 = vsel %vm122, %v792, %v793
    %v795 = vsel %vm122, %v793, %v792
    %v796 = vsel %vm95, %v791, %v795
    %v797 = vsel %vm96, %v791, %v794
    %v798 = vlaneseq
    %v799 = vshrl.u32 %v798, 7
    %v800 = vsub.s32 7, %v799
    %v801 = vrot.slane %v89, %v800
    %v802 = vrot.slane %v85, 1
    %v803 = vrot.slane %v86, 1
    %v804 = vsel %vm133, %v802, %v803
    %v805 = vsel %vm133, %v803, %v802
    %v806 = vsel %vm97, %v801, %v804
    %v807 = vsel %vm98, %v801, %v805
    %808 = vrot.lane.b32.xlu0 %v796, 1
    %v809 = vpop.permute.xlu0 %808
    %810 = vrot.lane.b32.xlu0 %v797, 1
    %v811 = vpop.permute.xlu0 %810
    %v812 = vsel %vm99, 0.0, %v809
    %v813 = vsel %vm99, 0.0, %v811
    %814 = vrot.lane.b32.xlu0 %v796, 127
    %v815 = vpop.permute.xlu0 %814
    %816 = vrot.lane.b32.xlu0 %v797, 127
    %v817 = vpop.permute.xlu0 %816
    %v818 = vsel %vm100, 0.0, %v815
    %v819 = vsel %vm100, 0.0, %v817
    %s820 = sld [smem:[#allocation9 + $0x1b]]
    %v821 = vstv %s820
    %v822 = vmul.f32 %v821, %v812
    %v823 = vmul.f32 %v821, %v813
    %v824 = vadd.f32 %v774, %v822
    %v825 = vadd.f32 %v775, %v823
    %s826 = sld [smem:[#allocation9 + $0x3f]]
    %v827 = vstv %s826
    %v828 = vmul.f32 %v827, %v812
    %v829 = vmul.f32 %v827, %v813
    %v830 = vadd.f32 %v780, %v828
    %v831 = vadd.f32 %v781, %v829
    %s832 = sld [smem:[#allocation9 + $0x63]]
    %v833 = vstv %s832
    %v834 = vmul.f32 %v833, %v812
    %v835 = vmul.f32 %v833, %v813
    %v836 = vadd.f32 %v786, %v834
    %v837 = vadd.f32 %v787, %v835
    %s838 = sld [smem:[#allocation9 + $0x1c]]
    %v839 = vstv %s838
    %v840 = vmul.f32 %v839, %v796
    %v841 = vmul.f32 %v839, %v797
    %v842 = vadd.f32 %v824, %v840
    %v843 = vadd.f32 %v825, %v841
    %s844 = sld [smem:[#allocation9 + $0x40]]
    %v845 = vstv %s844
    %v846 = vmul.f32 %v845, %v796
    %v847 = vmul.f32 %v845, %v797
    %v848 = vadd.f32 %v830, %v846
    %v849 = vadd.f32 %v831, %v847
    %s850 = sld [smem:[#allocation9 + $0x64]]
    %v851 = vstv %s850
    %v852 = vmul.f32 %v851, %v796
    %v853 = vmul.f32 %v851, %v797
    %v854 = vadd.f32 %v836, %v852
    %v855 = vadd.f32 %v837, %v853
    %s856 = sld [smem:[#allocation9 + $0x1d]]
    %v857 = vstv %s856
    %v858 = vmul.f32 %v857, %v818
    %v859 = vmul.f32 %v857, %v819
    %v860 = vadd.f32 %v842, %v858
    %v861 = vadd.f32 %v843, %v859
    %s862 = sld [smem:[#allocation9 + $0x41]]
    %v863 = vstv %s862
    %v864 = vmul.f32 %v863, %v818
    %v865 = vmul.f32 %v863, %v819
    %v866 = vadd.f32 %v848, %v864
    %v867 = vadd.f32 %v849, %v865
    %s868 = sld [smem:[#allocation9 + $0x65]]
    %v869 = vstv %s868
    %v870 = vmul.f32 %v869, %v818
    %v871 = vmul.f32 %v869, %v819
    %v872 = vadd.f32 %v854, %v870
    %v873 = vadd.f32 %v855, %v871
    %874 = vrot.lane.b32.xlu0 %v85, 1
    %v875 = vpop.permute.xlu0 %874
    %876 = vrot.lane.b32.xlu0 %v86, 1
    %v877 = vpop.permute.xlu0 %876
    %v878 = vsel %vm99, 0.0, %v875
    %v879 = vsel %vm99, 0.0, %v877
    %880 = vrot.lane.b32.xlu0 %v85, 127
    %v881 = vpop.permute.xlu0 %880
    %882 = vrot.lane.b32.xlu0 %v86, 127
    %v883 = vpop.permute.xlu0 %882
    %v884 = vsel %vm100, 0.0, %v881
    %v885 = vsel %vm100, 0.0, %v883
    %s886 = sld [smem:[#allocation9 + $0x1e]]
    %v887 = vstv %s886
    %v888 = vmul.f32 %v887, %v878
    %v889 = vmul.f32 %v887, %v879
    %v890 = vadd.f32 %v860, %v888
    %v891 = vadd.f32 %v861, %v889
    %s892 = sld [smem:[#allocation9 + $0x42]]
    %v893 = vstv %s892
    %v894 = vmul.f32 %v893, %v878
    %v895 = vmul.f32 %v893, %v879
    %v896 = vadd.f32 %v866, %v894
    %v897 = vadd.f32 %v867, %v895
    %s898 = sld [smem:[#allocation9 + $0x66]]
    %v899 = vstv %s898
    %v900 = vmul.f32 %v899, %v878
    %v901 = vmul.f32 %v899, %v879
    %v902 = vadd.f32 %v872, %v900
    %v903 = vadd.f32 %v873, %v901
    %s904 = sld [smem:[#allocation9 + $0x1f]]
    %v905 = vstv %s904
    %v906 = vmul.f32 %v905, %v85
    %v907 = vmul.f32 %v905, %v86
    %v908 = vadd.f32 %v890, %v906
    %v909 = vadd.f32 %v891, %v907
    %s910 = sld [smem:[#allocation9 + $0x43]]
    %v911 = vstv %s910
    %v912 = vmul.f32 %v911, %v85
    %v913 = vmul.f32 %v911, %v86
    %v914 = vadd.f32 %v896, %v912
    %v915 = vadd.f32 %v897, %v913
    %s916 = sld [smem:[#allocation9 + $0x67]]
    %v917 = vstv %s916
    %v918 = vmul.f32 %v917, %v85
    %v919 = vmul.f32 %v917, %v86
    %v920 = vadd.f32 %v902, %v918
    %v921 = vadd.f32 %v903, %v919
    %s922 = sld [smem:[#allocation9 + $0x20]]
    %v923 = vstv %s922
    %v924 = vmul.f32 %v923, %v884
    %v925 = vmul.f32 %v923, %v885
    %v926 = vadd.f32 %v908, %v924
    %v927 = vadd.f32 %v909, %v925
    %s928 = sld [smem:[#allocation9 + $0x44]]
    %v929 = vstv %s928
    %v930 = vmul.f32 %v929, %v884
    %v931 = vmul.f32 %v929, %v885
    %v932 = vadd.f32 %v914, %v930
    %v933 = vadd.f32 %v915, %v931
    %s934 = sld [smem:[#allocation9 + $0x68]]
    %v935 = vstv %s934
    %v936 = vmul.f32 %v935, %v884
    %v937 = vmul.f32 %v935, %v885
    %v938 = vadd.f32 %v920, %v936
    %v939 = vadd.f32 %v921, %v937
    %940 = vrot.lane.b32.xlu0 %v806, 1
    %v941 = vpop.permute.xlu0 %940
    %942 = vrot.lane.b32.xlu0 %v807, 1
    %v943 = vpop.permute.xlu0 %942
    %v944 = vsel %vm99, 0.0, %v941
    %v945 = vsel %vm99, 0.0, %v943
    %946 = vrot.lane.b32.xlu0 %v806, 127
    %v947 = vpop.permute.xlu0 %946
    %948 = vrot.lane.b32.xlu0 %v807, 127
    %v949 = vpop.permute.xlu0 %948
    %v950 = vsel %vm100, 0.0, %v947
    %v951 = vsel %vm100, 0.0, %v949
    %s952 = sld [smem:[#allocation9 + $0x21]]
    %v953 = vstv %s952
    %v954 = vmul.f32 %v953, %v944
    %v955 = vmul.f32 %v953, %v945
    %v956 = vadd.f32 %v926, %v954
    %v957 = vadd.f32 %v927, %v955
    %s958 = sld [smem:[#allocation9 + $0x45]]
    %v959 = vstv %s958
    %v960 = vmul.f32 %v959, %v944
    %v961 = vmul.f32 %v959, %v945
    %v962 = vadd.f32 %v932, %v960
    %v963 = vadd.f32 %v933, %v961
    %s964 = sld [smem:[#allocation9 + $0x69]]
    %v965 = vstv %s964
    %v966 = vmul.f32 %v965, %v944
    %v967 = vmul.f32 %v965, %v945
    %v968 = vadd.f32 %v938, %v966
    %v969 = vadd.f32 %v939, %v967
    %s970 = sld [smem:[#allocation9 + $0x22]]
    %v971 = vstv %s970
    %v972 = vmul.f32 %v971, %v806
    %v973 = vmul.f32 %v971, %v807
    %v974 = vadd.f32 %v956, %v972
    %v975 = vadd.f32 %v957, %v973
    %s976 = sld [smem:[#allocation9 + $0x46]]
    %v977 = vstv %s976
    %v978 = vmul.f32 %v977, %v806
    %v979 = vmul.f32 %v977, %v807
    %v980 = vadd.f32 %v962, %v978
    %v981 = vadd.f32 %v963, %v979
    %s982 = sld [smem:[#allocation9 + $0x6a]]
    %v983 = vstv %s982
    %v984 = vmul.f32 %v983, %v806
    %v985 = vmul.f32 %v983, %v807
    %v986 = vadd.f32 %v968, %v984
    %v987 = vadd.f32 %v969, %v985
    %s988 = sld [smem:[#allocation9 + $0x23]]
    %v989 = vstv %s988
    %v990 = vmul.f32 %v989, %v950
    %v991 = vmul.f32 %v989, %v951
    %v992 = vadd.f32 %v974, %v990
    %v993 = vadd.f32 %v975, %v991
    %s994 = sld [smem:[#allocation9 + $0x47]]
    %v995 = vstv %s994
    %v996 = vmul.f32 %v995, %v950
    %v997 = vmul.f32 %v995, %v951
    %v998 = vadd.f32 %v980, %v996
    %v999 = vadd.f32 %v981, %v997
    %s1000 = sld [smem:[#allocation9 + $0x6b]]
    %v1001 = vstv %s1000
    %v1002 = vmul.f32 %v1001, %v950
    %v1003 = vmul.f32 %v1001, %v951
    %v1004 = vadd.f32 %v986, %v1002
    %v1005 = vadd.f32 %v987, %v1003
    %v1006 = vxor.u32 %v992, 2147483648
    %v1007 = vxor.u32 %v993, 2147483648
    %v1008 = vmul.f32 %v1006, 1.442695
    %v1009 = vpow.pop %v1008
    %v1010 = vmul.f32 %v1007, 1.442695
    %v1011 = vpow.pop %v1010
    %v1012 = vadd.f32 %v1009, 1.0
    %v1013 = vadd.f32 %v1011, 1.0
    %v1014 = vrcp.pop %v1012
    %v1015 = vmul.f32 1.0, %v1014
    %v1016 = vrcp.pop %v1013
    %v1017 = vmul.f32 1.0, %v1016
    %v1018 = vmul.f32 %v85, %v1015
    %v1019 = vmul.f32 %v86, %v1017
    %v1020 = vadd.f32 %v1018, %v109
    %v1021 = vadd.f32 %v1019, %v110
    %1022 = vst [vmem:[#allocation12] sm:$0xff] %v1020
    %1023 = vst [vmem:[#allocation12 + $0x8] sm:$0xff] %v1021
    %v1024 = vxor.u32 %v998, 2147483648
    %v1025 = vxor.u32 %v999, 2147483648
    %v1026 = vmul.f32 %v1024, 1.442695
    %v1027 = vpow.pop %v1026
    %v1028 = vmul.f32 %v1025, 1.442695
    %v1029 = vpow.pop %v1028
    %v1030 = vadd.f32 %v1027, 1.0
    %v1031 = vadd.f32 %v1029, 1.0
    %v1032 = vrcp.pop %v1030
    %v1033 = vmul.f32 1.0, %v1032
    %v1034 = vrcp.pop %v1031
    %v1035 = vmul.f32 1.0, %v1034
    %v1036 = vmul.f32 %v85, %v1033
    %v1037 = vmul.f32 %v86, %v1035
    %v1038 = vld [vmem:[%s336] sm:$0xff]
    %v1039 = vld [vmem:[%s336 + $0x8] sm:$0xff]
    %v1040 = vmul.f32 %v87, %v1038
    %v1041 = vmul.f32 %v88, %v1039
    %v1042 = vadd.f32 %v1036, %v1040
    %v1043 = vadd.f32 %v1037, %v1041
    %s1044 = scalar_lea.vmem [#allocation12], 16
    %1045 = vst [vmem:[%s1044] sm:$0xff] %v1042
    %1046 = vst [vmem:[%s1044 + $0x8] sm:$0xff] %v1043
    %v1047 = vxor.u32 %v1004, 2147483648
    %v1048 = vxor.u32 %v1005, 2147483648
    %v1049 = vmul.f32 %v1047, 1.442695
    %v1050 = vpow.pop %v1049
    %v1051 = vmul.f32 %v1048, 1.442695
    %v1052 = vpow.pop %v1051
    %v1053 = vadd.f32 %v1050, 1.0
    %v1054 = vadd.f32 %v1052, 1.0
    %v1055 = vrcp.pop %v1053
    %v1056 = vmul.f32 1.0, %v1055
    %v1057 = vrcp.pop %v1054
    %v1058 = vmul.f32 1.0, %v1057
    %v1059 = vmul.f32 %v85, %v1056
    %v1060 = vmul.f32 %v86, %v1058
    %v1061 = vld [vmem:[%s562] sm:$0xff]
    %v1062 = vld [vmem:[%s562 + $0x8] sm:$0xff]
    %v1063 = vmul.f32 %v87, %v1061
    %v1064 = vmul.f32 %v88, %v1062
    %v1065 = vadd.f32 %v1059, %v1063
    %v1066 = vadd.f32 %v1060, %v1064
    %s1067 = scalar_lea.vmem [#allocation12], 32
    %1068 = vst [vmem:[%s1067] sm:$0xff] %v1065
    %1069 = vst [vmem:[%s1067 + $0x8] sm:$0xff] %v1066
    // Predicated region
    $region42: #{tpu_custom_call.1} parent=1 // pred_check
      _
    $region43: #{tpu_custom_call.1} parent=1 // pred_check_branch
      %1071 = sbr.rel (0) target = $region45
    $region44: #{tpu_custom_call.1} parent=1 // pred_region
      %s1073 = ssub.s32 768, 768
      %1074 = vsyncadd [#allocation4], %s1073
      %s1075 = sshll.u32 [#allocation12], 4
      %s1076 = int_to_ptr.vmem [resolvable:$true] %s1075
      %1081 = dma.vmem_to_hbm [thread:$0]  %s1076, 768, %s5, [#allocation4], 128, 128, 8
    $region45: #{tpu_custom_call.1} parent=1 // pred_fallthru
      _
    // Predicated region
    $region46: #{tpu_custom_call.1} parent=1 // pred_check
      _
    $region47: #{tpu_custom_call.1} parent=1 // pred_check_branch
      %1083 = sbr.rel (0) target = $region49
    $region48: #{tpu_custom_call.1} parent=1 // pred_region
      %1084 = dma.done [#allocation4], 768
    $region49: #{tpu_custom_call.1} parent=1 // pred_fallthru
      _
    %1085 = vsyncpa [#allocation3], 1
    %1086 = vsyncpa [#allocation7], 1
    %1087 = vsyncpa [#allocation4], 1
    %1088 = vsyncpa [#allocation5], 1
    %1089 = vsyncpa [#allocation11], 1

</llo_original>
